<compile_context>
chip_gen: v5e
topology: v5e:2x2
jax: 0.10.0
libtpu: 0.0.40
codegen_flags: <defaults>
</compile_context>

<pallas_src>
import math

import jax
import jax.numpy as jnp
from jax.experimental import pallas as pl
from jax.experimental.pallas import tpu as pltpu

EPS = 1e-5     # torch.nn.BatchNorm1d default eps
LANE = 128     # TPU lane width


def _round_up(x, m):
    return (x + m - 1) // m * m


def _make_kernel(B_t, L, L1, C_pi, C_po, stride, compute_dtype, scratch_dtype):
    """Per-grid-step kernel processing B_t batch elements. stride in {1, 2}."""
    P1 = L + 2            # per-batch row period in the conv1 halo buffer
    P2 = L1 + 2           # per-batch row period in the conv2 halo buffer
    M1 = B_t * P1 - 2     # rows of the folded conv1 matmul output
    M2 = B_t * P2 - 2     # rows of the folded conv2 matmul output
    cdt = compute_dtype
    sdt = scratch_dtype
    f32 = jnp.float32

    def body(x_ref,            # (B_t, L, C_pi)  f32
             xdec_ref,         # (B_t, L1, C_pi) f32 (stride==2 only, else None)
             s1_ref, t1_ref,   # (1, C_pi) fused BN1 scale / shift
             w1_ref,           # (3, C_pi, C_pi) compute dtype
             s2_ref, t2_ref,   # (1, C_pi) fused BN2 scale / shift
             w2_ref,           # (3, C_pi, C_po) compute dtype
             wsc_ref,          # (C_pi, C_po)    compute dtype
             o_ref,            # (B_t, L1, C_po) f32
             apad_ref,         # scratch (B_t*P1, C_pi)  sdt — conv1 halo buffer
             hpad_ref,         # scratch (B_t*P2, C_pi)  sdt — conv2 halo buffer
             xsc_ref):         # scratch (B_t*L1, C_pi)  cdt — shortcut input
        zrow = jnp.zeros((1, C_pi), sdt)

        s1 = s1_ref[...]
        t1 = t1_ref[...]
        s2 = s2_ref[...]
        t2 = t2_ref[...]

        # ---- BN1 (fused, eval mode) + ReLU over the whole batch tile ----
        a = jnp.maximum(x_ref[...] * s1 + t1, 0.0).astype(sdt)   # (B_t, L, C_pi)

        # ---- fill conv1 halo buffer [0 | a_b | 0] per batch element, and the
        #      densely packed shortcut-input scratch (stores only — all matmuls
        #      below are folded over the batch dimension). ----
        for b in range(B_t):
            base = b * P1
            apad_ref[pl.ds(base, 1), :] = zrow
            apad_ref[pl.ds(base + 1, L), :] = a[b]
            apad_ref[pl.ds(base + L + 1, 1), :] = zrow
            if stride == 1:
                xsc_ref[pl.ds(b * L1, L1), :] = x_ref[b].astype(cdt)
            else:
                xsc_ref[pl.ds(b * L1, L1), :] = xdec_ref[b].astype(cdt)

        if stride == 1:
            # ---- conv1: ONE (M1, C_pi) @ (C_pi, C_pi) matmul per tap ----
            h = jnp.dot(apad_ref[pl.ds(0, M1), :].astype(cdt), w1_ref[0],
                        preferred_element_type=f32)
            for k in (1, 2):
                h = h + jnp.dot(apad_ref[pl.ds(k, M1), :].astype(cdt), w1_ref[k],
                                preferred_element_type=f32)
            # ---- BN2 + ReLU (rows at batch seams are junk, never read back) ----
            bact = jnp.maximum(h * s2 + t2, 0.0).astype(sdt)      # (M1, C_pi)
            for b in range(B_t):
                base2 = b * P2
                hpad_ref[pl.ds(base2, 1), :] = zrow
                hpad_ref[pl.ds(base2 + 1, L1), :] = bact[b * P1:b * P1 + L1]
                hpad_ref[pl.ds(base2 + L1 + 1, 1), :] = zrow
        else:
            # ---- stride == 2: strided taps per batch element (exact FLOPs;
            #      avoids decimating a folded result). Strided pl.ds reads are
            #      only ever used on 2-D scratch refs. ----
            for b in range(B_t):
                base = b * P1
                hb = jnp.dot(
                    apad_ref[pl.ds(base + 0, L1, stride=stride), :].astype(cdt),
                    w1_ref[0], preferred_element_type=f32)
                for k in (1, 2):
                    hb = hb + jnp.dot(
                        apad_ref[pl.ds(base + k, L1, stride=stride), :].astype(cdt),
                        w1_ref[k], preferred_element_type=f32)
                bact_b = jnp.maximum(hb * s2 + t2, 0.0).astype(sdt)
                base2 = b * P2
                hpad_ref[pl.ds(base2, 1), :] = zrow
                hpad_ref[pl.ds(base2 + 1, L1), :] = bact_b
                hpad_ref[pl.ds(base2 + L1 + 1, 1), :] = zrow

        # ---- conv2 (kernel 3, stride 1): folded over all batch elements ----
        r = jnp.dot(hpad_ref[pl.ds(0, M2), :].astype(cdt), w2_ref[0],
                    preferred_element_type=f32)
        for k in (1, 2):
            r = r + jnp.dot(hpad_ref[pl.ds(k, M2), :].astype(cdt), w2_ref[k],
                            preferred_element_type=f32)

        # ---- shortcut 1x1 conv: one folded matmul ----
        sc = jnp.dot(xsc_ref[...], wsc_ref[...], preferred_element_type=f32)

        # ---- write valid rows per batch element ----
        for b in range(B_t):
            o_ref[b] = (r[b * P2:b * P2 + L1]
                        + sc[b * L1:(b + 1) * L1]).astype(o_ref.dtype)

    if stride == 1:
        def kernel(x_ref, s1_ref, t1_ref, w1_ref, s2_ref, t2_ref, w2_ref,
                   wsc_ref, o_ref, apad_ref, hpad_ref, xsc_ref):
            body(x_ref, None, s1_ref, t1_ref, w1_ref, s2_ref, t2_ref,
                 w2_ref, wsc_ref, o_ref, apad_ref, hpad_ref, xsc_ref)
    else:
        def kernel(x_ref, xdec_ref, s1_ref, t1_ref, w1_ref, s2_ref, t2_ref,
                   w2_ref, wsc_ref, o_ref, apad_ref, hpad_ref, xsc_ref):
            body(x_ref, xdec_ref, s1_ref, t1_ref, w1_ref, s2_ref, t2_ref,
                 w2_ref, wsc_ref, o_ref, apad_ref, hpad_ref, xsc_ref)
    return kernel


def _padded_bytes(shape, dtype):
    """VMEM footprint estimate with (8, 128) tile padding on the minor dims."""
    s = list(shape)
    s[-1] = _round_up(s[-1], LANE)
    if len(s) >= 2:
        s[-2] = _round_up(s[-2], 8)
    return math.prod(s) * jnp.dtype(dtype).itemsize


def preact_residual_unit(x_ncl, params, *, stride, is_turn=False,
                         compute_dtype=jnp.float32, batch_block=None):
    """x_ncl: (N, C_in, L) float32, PyTorch layout. Returns (N, C_out, L_out)."""
    N, C_in, L = x_ncl.shape
    C_mid, C_in_w, K1 = params["conv1_w"].shape
    assert C_in_w == C_in and K1 == 3 and C_mid == C_in, "inner_channels == in_channels"
    C_out = params["conv2_w"].shape[0]
    assert stride in (1, 2)
    has_shortcut = (stride != 2) or (C_in != C_out) or is_turn
    if not has_shortcut:
        # PyTorch's identity shortcut in this configuration adds an (N,C,L)
        # tensor to an (N,C,L/2) tensor and fails there as well.
        raise NotImplementedError(
            "identity shortcut with stride=2 is shape-inconsistent in the "
            "reference module; not supported")
    L1 = (L - 1) // stride + 1          # conv1 / shortcut output length

    # Lane-dense channel padding (multiple of 128); padded channels stay zero.
    C_pi = _round_up(C_in, LANE)
    C_po = _round_up(C_out, LANE)

    # Batch block: fold several batch elements into the matmul M dimension,
    # preferring >= 2 grid steps so a "parallel" axis can shard across TCs.
    if batch_block is None:
        cap = min(N, 8)
        cands = [c for c in range(1, cap + 1) if N % c == 0]
        two_step = [c for c in cands if N // c >= 2]
        batch_block = max(two_step) if two_step else max(cands)
    B_t = batch_block
    assert N % B_t == 0
    grid = (N // B_t,)
    P1, P2 = L + 2, L1 + 2

    scratch_dtype = compute_dtype if stride == 1 else jnp.float32

    # ---------------- parameter prep (once, cheap O(C)/O(C^2) XLA ops) --------
    f32 = jnp.float32

    def fused_bn(g, b, m, v, width):
        s = (g * jax.lax.rsqrt(v.astype(f32) + EPS)).astype(f32)
        t = (b - m * s).astype(f32)
        pad = width - s.shape[0]
        s = jnp.pad(s, (0, pad)).reshape(1, width)
        t = jnp.pad(t, (0, pad)).reshape(1, width)
        return s, t

    s1, t1 = fused_bn(params["bn1_g"], params["bn1_b"],
                      params["bn1_m"], params["bn1_v"], C_pi)
    s2, t2 = fused_bn(params["bn2_g"], params["bn2_b"],
                      params["bn2_m"], params["bn2_v"], C_pi)

    def conv_w(w, ci_pad, co_pad):
        # torch (C_out, C_in, K) -> (K, C_in_pad, C_out_pad), cast to MXU dtype.
        w = jnp.transpose(w, (2, 1, 0)).astype(f32)
        w = jnp.pad(w, ((0, 0),
                        (0, ci_pad - w.shape[1]),
                        (0, co_pad - w.shape[2])))
        return w.astype(compute_dtype)

    w1 = conv_w(params["conv1_w"], C_pi, C_pi)          # (3, C_pi, C_pi)
    w2 = conv_w(params["conv2_w"], C_pi, C_po)          # (3, C_pi, C_po)
    wsc = conv_w(params["sc_w"], C_pi, C_po)[0]         # (C_pi, C_po)

    # channels-last + lane padding
    x = jnp.transpose(x_ncl, (0, 2, 1)).astype(f32)     # (N, L, C_in)
    x = jnp.pad(x, ((0, 0), (0, 0), (0, C_pi - C_in)))  # (N, L, C_pi)

    kernel = _make_kernel(B_t, L, L1, C_pi, C_po, stride,
                          compute_dtype, scratch_dtype)

    def fixed(shape):  # parameter BlockSpec: whole array, same block every step
        return pl.BlockSpec(shape, lambda g: (0,) * len(shape))

    inputs = [x]
    in_specs = [pl.BlockSpec((B_t, L, C_pi), lambda g: (g, 0, 0))]
    in_blocks = [((B_t, L, C_pi), f32)]
    if stride == 2:
        x_dec = x[:, ::stride, :]                        # (N, L1, C_pi)
        inputs.append(x_dec)
        in_specs.append(pl.BlockSpec((B_t, L1, C_pi), lambda g: (g, 0, 0)))
        in_blocks.append(((B_t, L1, C_pi), f32))

    inputs += [s1, t1, w1, s2, t2, w2, wsc]
    in_specs += [fixed((1, C_pi)), fixed((1, C_pi)),
                 fixed((3, C_pi, C_pi)),
                 fixed((1, C_pi)), fixed((1, C_pi)),
                 fixed((3, C_pi, C_po)),
                 fixed((C_pi, C_po))]
    in_blocks += [((1, C_pi), f32), ((1, C_pi), f32),
                  ((3, C_pi, C_pi), compute_dtype),
                  ((1, C_pi), f32), ((1, C_pi), f32),
                  ((3, C_pi, C_po), compute_dtype),
                  ((C_pi, C_po), compute_dtype)]

    scratch_shapes = [
        pltpu.VMEM((B_t * P1, C_pi), scratch_dtype),     # conv1 halo buffer
        pltpu.VMEM((B_t * P2, C_pi), scratch_dtype),     # conv2 halo buffer
        pltpu.VMEM((B_t * L1, C_pi), compute_dtype),     # shortcut input (dense)
    ]

    # VMEM budget: double-buffered in/out blocks + single-buffered scratch,
    # with 2x headroom, clamped to 3/4 of physical VMEM (v7x has 64 MiB).
    est = sum(2 * _padded_bytes(s, d) for s, d in in_blocks)
    est += 2 * _padded_bytes((B_t, L1, C_po), f32)
    est += _padded_bytes((B_t * P1, C_pi), scratch_dtype)
    est += _padded_bytes((B_t * P2, C_pi), scratch_dtype)
    est += _padded_bytes((B_t * L1, C_pi), compute_dtype)
    try:
        phys_vmem = int(pltpu.get_tpu_info().vmem_capacity_bytes)
    except Exception:
        phys_vmem = 64 * 1024 * 1024
    vmem_limit = min(phys_vmem * 3 // 4,
                     max(32 * 1024 * 1024, 2 * est + (4 << 20)))

    out = pl.pallas_call(
        kernel,
        out_shape=jax.ShapeDtypeStruct((N, L1, C_po), jnp.float32),
        grid_spec=pltpu.PrefetchScalarGridSpec(
            num_scalar_prefetch=0,
            grid=grid,
            in_specs=in_specs,
            out_specs=pl.BlockSpec((B_t, L1, C_po), lambda g: (g, 0, 0)),
            scratch_shapes=scratch_shapes,
        ),
        compiler_params=pltpu.CompilerParams(
            dimension_semantics=("parallel",),
            vmem_limit_bytes=int(vmem_limit),
        ),
    )(*inputs)

    out = out[:, :, :C_out]                              # drop lane padding
    return jnp.transpose(out, (0, 2, 1))                 # (N, C_out, L1)


# ---------------- pure-JAX reference (mirrors the PyTorch forward) ----------------
def _ref_forward(x, params, *, stride, is_turn=False):
    C_in = x.shape[1]
    C_out = params["conv2_w"].shape[0]
    has_shortcut = (stride != 2) or (C_in != C_out) or is_turn

    def bn(x, g, b, m, v):
        return (x - m[None, :, None]) * jax.lax.rsqrt(v[None, :, None] + EPS) \
               * g[None, :, None] + b[None, :, None]

    def conv1d(x, w, stride, pad):
        return jax.lax.conv_general_dilated(
            x, w, (stride,), [(pad, pad)],
            dimension_numbers=("NCH", "OIH", "NCH"),
            precision=jax.lax.Precision.HIGHEST)

    a = jnp.maximum(bn(x, params["bn1_g"], params["bn1_b"],
                       params["bn1_m"], params["bn1_v"]), 0.0)
    h = conv1d(a, params["conv1_w"], stride, 1)
    b = jnp.maximum(bn(h, params["bn2_g"], params["bn2_b"],
                       params["bn2_m"], params["bn2_v"]), 0.0)
    res = conv1d(b, params["conv2_w"], 1, 1)
    sc = conv1d(x, params["sc_w"], stride, 0) if has_shortcut else x
    return res + sc


def _init_params(key, C_in, C_out):
    C_mid = C_in
    ks = jax.random.split(key, 11)
    return {
        # BatchNorm1d(in_channels) — eval-mode running stats + affine params
        "bn1_g": 1.0 + 0.1 * jax.random.normal(ks[0], (C_in,), jnp.float32),
        "bn1_b": 0.1 * jax.random.normal(ks[1], (C_in,), jnp.float32),
        "bn1_m": 0.1 * jax.random.normal(ks[2], (C_in,), jnp.float32),
        "bn1_v": 0.5 + jnp.abs(jax.random.normal(ks[3], (C_in,), jnp.float32)) * 0.2,
        # Conv1d(in, inner, 3, stride, pad=1, bias=False): torch shape (inner, in, 3)
        "conv1_w": 0.2 * jax.random.normal(ks[4], (C_mid, C_in, 3), jnp.float32),
        # BatchNorm1d(inner_channels)
        "bn2_g": 1.0 + 0.1 * jax.random.normal(ks[5], (C_mid,), jnp.float32),
        "bn2_b": 0.1 * jax.random.normal(ks[6], (C_mid,), jnp.float32),
        "bn2_m": 0.1 * jax.random.normal(ks[7], (C_mid,), jnp.float32),
        "bn2_v": 0.5 + jnp.abs(jax.random.normal(ks[8], (C_mid,), jnp.float32)) * 0.2,
        # Conv1d(inner, out, 3, stride=1, pad=1, bias=False): (out, inner, 3)
        "conv2_w": 0.2 * jax.random.normal(ks[9], (C_out, C_mid, 3), jnp.float32),
        # Shortcut Conv1d(in, out, 1, stride, bias=False): (out, in, 1)
        "sc_w": 0.2 * jax.random.normal(ks[10], (C_out, C_in, 1), jnp.float32),
    }


if __name__ == "__main__":
    key = jax.random.PRNGKey(0)
    k1, k2, k3, k4 = jax.random.split(key, 4)

    # --- case 1: stride=1, f32 compute ---
    N, C_in, C_out, L = 4, 4, 8, 16
    x = jax.random.normal(k1, (N, C_in, L), jnp.float32)    # PyTorch NCL layout
    params = _init_params(k2, C_in, C_out)

    out = jax.block_until_ready(preact_residual_unit(x, params, stride=1))
    ref = jax.block_until_ready(_ref_forward(x, params, stride=1))
    assert out.shape == ref.shape, (out.shape, ref.shape)
    assert jnp.allclose(out, ref, rtol=1e-2, atol=1e-2), \
        float(jnp.max(jnp.abs(out - ref)))

    # --- case 2: stride=2 downsampling, odd L (strided taps + decimated shortcut) ---
    N2, C_in2, C_out2, L2 = 2, 4, 8, 15
    x2 = jax.random.normal(k3, (N2, C_in2, L2), jnp.float32)
    params2 = _init_params(k4, C_in2, C_out2)

    out2 = jax.block_until_ready(preact_residual_unit(x2, params2, stride=2))
    ref2 = jax.block_until_ready(_ref_forward(x2, params2, stride=2))
    assert out2.shape == ref2.shape, (out2.shape, ref2.shape)
    assert jnp.allclose(out2, ref2, rtol=1e-2, atol=1e-2), \
        float(jnp.max(jnp.abs(out2 - ref2)))

    # --- case 3: bf16 MXU dots with f32 accumulation (v6e/v7x), looser check ---
    out3 = jax.block_until_ready(
        preact_residual_unit(x, params, stride=1, compute_dtype=jnp.bfloat16))
    assert jnp.allclose(out3, ref, rtol=5e-2, atol=1e-1), \
        float(jnp.max(jnp.abs(out3 - ref)))

    print("KERNEL_OK")
</pallas_src>

<mosaic_0001>
module attributes {stable_mosaic.version = 11 : i64} {
  func.func @kernel(%arg0: i32, %arg1: memref<2x16x128xf32, #tpu.memory_space<vmem>>, %arg2: memref<1x128xf32, #tpu.memory_space<vmem>>, %arg3: memref<1x128xf32, #tpu.memory_space<vmem>>, %arg4: memref<3x128x128xf32, #tpu.memory_space<vmem>>, %arg5: memref<1x128xf32, #tpu.memory_space<vmem>>, %arg6: memref<1x128xf32, #tpu.memory_space<vmem>>, %arg7: memref<3x128x128xf32, #tpu.memory_space<vmem>>, %arg8: memref<128x128xf32, #tpu.memory_space<vmem>>, %arg9: memref<2x16x128xf32, #tpu.memory_space<vmem>>, %arg10: memref<36x128xf32, #tpu.memory_space<vmem>>, %arg11: memref<36x128xf32, #tpu.memory_space<vmem>>, %arg12: memref<32x128xf32, #tpu.memory_space<vmem>>) attributes {dimension_semantics = [#tpu.dimension_semantics<parallel>], iteration_bounds = array<i64: 2>, scalar_prefetch = 0 : i64, scratch_operands = 3 : i64, tpu.core_type = #tpu.core_type<tc>, window_params = [{transform_indices = @transform_0, window_bounds = array<i64: 2, 16, 128>}, {pipeline_mode = #tpu.pipeline_mode<synchronous>, transform_indices = @transform_1, window_bounds = array<i64: 1, 128>}, {pipeline_mode = #tpu.pipeline_mode<synchronous>, transform_indices = @transform_2, window_bounds = array<i64: 1, 128>}, {pipeline_mode = #tpu.pipeline_mode<synchronous>, transform_indices = @transform_3, window_bounds = array<i64: 3, 128, 128>}, {pipeline_mode = #tpu.pipeline_mode<synchronous>, transform_indices = @transform_4, window_bounds = array<i64: 1, 128>}, {pipeline_mode = #tpu.pipeline_mode<synchronous>, transform_indices = @transform_5, window_bounds = array<i64: 1, 128>}, {pipeline_mode = #tpu.pipeline_mode<synchronous>, transform_indices = @transform_6, window_bounds = array<i64: 3, 128, 128>}, {pipeline_mode = #tpu.pipeline_mode<synchronous>, transform_indices = @transform_7, window_bounds = array<i64: 128, 128>}, {transform_indices = @transform_8, window_bounds = array<i64: 2, 16, 128>}]} {
    %cst = arith.constant 0.000000e+00 : f32
    %0 = vector.broadcast %cst : f32 to vector<1x128xf32>
    %c0 = arith.constant 0 : index
    %c0_0 = arith.constant 0 : index
    %1 = vector.load %arg2[%c0, %c0_0] : memref<1x128xf32, #tpu.memory_space<vmem>>, vector<1x128xf32>
    %c0_1 = arith.constant 0 : index
    %c0_2 = arith.constant 0 : index
    %2 = vector.load %arg3[%c0_1, %c0_2] : memref<1x128xf32, #tpu.memory_space<vmem>>, vector<1x128xf32>
    %c0_3 = arith.constant 0 : index
    %c0_4 = arith.constant 0 : index
    %3 = vector.load %arg5[%c0_3, %c0_4] : memref<1x128xf32, #tpu.memory_space<vmem>>, vector<1x128xf32>
    %c0_5 = arith.constant 0 : index
    %c0_6 = arith.constant 0 : index
    %4 = vector.load %arg6[%c0_5, %c0_6] : memref<1x128xf32, #tpu.memory_space<vmem>>, vector<1x128xf32>
    %c0_7 = arith.constant 0 : index
    %c0_8 = arith.constant 0 : index
    %c0_9 = arith.constant 0 : index
    %5 = vector.load %arg1[%c0_7, %c0_8, %c0_9] : memref<2x16x128xf32, #tpu.memory_space<vmem>>, vector<2x16x128xf32>
    %6 = vector.shape_cast %1 : vector<1x128xf32> to vector<1x1x128xf32>
    %7 = vector.broadcast %6 : vector<1x1x128xf32> to vector<2x16x128xf32>
    %8 = arith.mulf %5, %7 : vector<2x16x128xf32>
    %9 = vector.shape_cast %2 : vector<1x128xf32> to vector<1x1x128xf32>
    %10 = vector.broadcast %9 : vector<1x1x128xf32> to vector<2x16x128xf32>
    %11 = arith.addf %8, %10 : vector<2x16x128xf32>
    %cst_10 = arith.constant 0.000000e+00 : f32
    %12 = vector.broadcast %cst_10 : f32 to vector<2x16x128xf32>
    %13 = arith.maximumf %11, %12 : vector<2x16x128xf32>
    %c0_11 = arith.constant 0 : index
    %c0_12 = arith.constant 0 : index
    %14 = vector.load %arg10[%c0_11, %c0_12] : memref<36x128xf32, #tpu.memory_space<vmem>>, vector<1x128xf32>
    tpu.vector_store %arg10[%c0_11, %c0_12], %0 {strides = array<i32>} : memref<36x128xf32, #tpu.memory_space<vmem>>, vector<1x128xf32>,
    %15 = vector.extract_strided_slice %13 {offsets = [0, 0, 0], sizes = [1, 16, 128], strides = [1, 1, 1]} : vector<2x16x128xf32> to vector<1x16x128xf32>
    %16 = vector.shape_cast %15 : vector<1x16x128xf32> to vector<16x128xf32>
    %c1 = arith.constant 1 : index
    %c0_13 = arith.constant 0 : index
    %17 = vector.load %arg10[%c1, %c0_13] : memref<36x128xf32, #tpu.memory_space<vmem>>, vector<16x128xf32>
    tpu.vector_store %arg10[%c1, %c0_13], %16 {strides = array<i32>} : memref<36x128xf32, #tpu.memory_space<vmem>>, vector<16x128xf32>,
    %c17 = arith.constant 17 : index
    %c0_14 = arith.constant 0 : index
    %18 = vector.load %arg10[%c17, %c0_14] : memref<36x128xf32, #tpu.memory_space<vmem>>, vector<1x128xf32>
    tpu.vector_store %arg10[%c17, %c0_14], %0 {strides = array<i32>} : memref<36x128xf32, #tpu.memory_space<vmem>>, vector<1x128xf32>,
    %c0_15 = arith.constant 0 : index
    %c0_16 = arith.constant 0 : index
    %c0_17 = arith.constant 0 : index
    %19 = vector.load %arg1[%c0_15, %c0_16, %c0_17] : memref<2x16x128xf32, #tpu.memory_space<vmem>>, vector<1x16x128xf32>
    %20 = vector.shape_cast %19 : vector<1x16x128xf32> to vector<16x128xf32>
    %c0_18 = arith.constant 0 : index
    %c0_19 = arith.constant 0 : index
    %21 = vector.load %arg12[%c0_18, %c0_19] : memref<32x128xf32, #tpu.memory_space<vmem>>, vector<16x128xf32>
    tpu.vector_store %arg12[%c0_18, %c0_19], %20 {strides = array<i32>} : memref<32x128xf32, #tpu.memory_space<vmem>>, vector<16x128xf32>,
    %c18 = arith.constant 18 : index
    %c0_20 = arith.constant 0 : index
    %22 = vector.load %arg10[%c18, %c0_20] : memref<36x128xf32, #tpu.memory_space<vmem>>, vector<1x128xf32>
    tpu.vector_store %arg10[%c18, %c0_20], %0 {strides = array<i32>} : memref<36x128xf32, #tpu.memory_space<vmem>>, vector<1x128xf32>,
    %23 = vector.extract_strided_slice %13 {offsets = [1, 0, 0], sizes = [1, 16, 128], strides = [1, 1, 1]} : vector<2x16x128xf32> to vector<1x16x128xf32>
    %24 = vector.shape_cast %23 : vector<1x16x128xf32> to vector<16x128xf32>
    %c19 = arith.constant 19 : index
    %c0_21 = arith.constant 0 : index
    %25 = vector.load %arg10[%c19, %c0_21] : memref<36x128xf32, #tpu.memory_space<vmem>>, vector<16x128xf32>
    tpu.vector_store %arg10[%c19, %c0_21], %24 {strides = array<i32>} : memref<36x128xf32, #tpu.memory_space<vmem>>, vector<16x128xf32>,
    %c35 = arith.constant 35 : index
    %c0_22 = arith.constant 0 : index
    %26 = vector.load %arg10[%c35, %c0_22] : memref<36x128xf32, #tpu.memory_space<vmem>>, vector<1x128xf32>
    tpu.vector_store %arg10[%c35, %c0_22], %0 {strides = array<i32>} : memref<36x128xf32, #tpu.memory_space<vmem>>, vector<1x128xf32>,
    %c1_23 = arith.constant 1 : index
    %c0_24 = arith.constant 0 : index
    %c0_25 = arith.constant 0 : index
    %27 = vector.load %arg1[%c1_23, %c0_24, %c0_25] : memref<2x16x128xf32, #tpu.memory_space<vmem>>, vector<1x16x128xf32>
    %28 = vector.shape_cast %27 : vector<1x16x128xf32> to vector<16x128xf32>
    %c16 = arith.constant 16 : index
    %c0_26 = arith.constant 0 : index
    %29 = vector.load %arg12[%c16, %c0_26] : memref<32x128xf32, #tpu.memory_space<vmem>>, vector<16x128xf32>
    tpu.vector_store %arg12[%c16, %c0_26], %28 {strides = array<i32>} : memref<32x128xf32, #tpu.memory_space<vmem>>, vector<16x128xf32>,
    %c0_27 = arith.constant 0 : index
    %c0_28 = arith.constant 0 : index
    %30 = vector.load %arg10[%c0_27, %c0_28] : memref<36x128xf32, #tpu.memory_space<vmem>>, vector<34x128xf32>
    %c0_29 = arith.constant 0 : index
    %c0_30 = arith.constant 0 : index
    %c0_31 = arith.constant 0 : index
    %31 = vector.load %arg4[%c0_29, %c0_30, %c0_31] : memref<3x128x128xf32, #tpu.memory_space<vmem>>, vector<1x128x128xf32>
    %32 = vector.shape_cast %31 : vector<1x128x128xf32> to vector<128x128xf32>
    %cst_32 = arith.constant dense<0.000000e+00> : vector<34x128xf32>
    %33 = tpu.matmul %30, %32, %cst_32 {dimension_numbers = #tpu.dot_dimension_numbers<[1], [0], [0], [1], [0, 0, 1, 1], [], []>} : vector<34x128xf32>, vector<128x128xf32>, vector<34x128xf32> -> vector<34x128xf32>
    %c1_33 = arith.constant 1 : index
    %c0_34 = arith.constant 0 : index
    %34 = vector.load %arg10[%c1_33, %c0_34] : memref<36x128xf32, #tpu.memory_space<vmem>>, vector<34x128xf32>
    %c1_35 = arith.constant 1 : index
    %c0_36 = arith.constant 0 : index
    %c0_37 = arith.constant 0 : index
    %35 = vector.load %arg4[%c1_35, %c0_36, %c0_37] : memref<3x128x128xf32, #tpu.memory_space<vmem>>, vector<1x128x128xf32>
    %36 = vector.shape_cast %35 : vector<1x128x128xf32> to vector<128x128xf32>
    %cst_38 = arith.constant dense<0.000000e+00> : vector<34x128xf32>
    %37 = tpu.matmul %34, %36, %cst_38 {dimension_numbers = #tpu.dot_dimension_numbers<[1], [0], [0], [1], [0, 0, 1, 1], [], []>} : vector<34x128xf32>, vector<128x128xf32>, vector<34x128xf32> -> vector<34x128xf32>
    %38 = arith.addf %33, %37 : vector<34x128xf32>
    %c2 = arith.constant 2 : index
    %c0_39 = arith.constant 0 : index
    %39 = vector.load %arg10[%c2, %c0_39] : memref<36x128xf32, #tpu.memory_space<vmem>>, vector<34x128xf32>
    %c2_40 = arith.constant 2 : index
    %c0_41 = arith.constant 0 : index
    %c0_42 = arith.constant 0 : index
    %40 = vector.load %arg4[%c2_40, %c0_41, %c0_42] : memref<3x128x128xf32, #tpu.memory_space<vmem>>, vector<1x128x128xf32>
    %41 = vector.shape_cast %40 : vector<1x128x128xf32> to vector<128x128xf32>
    %cst_43 = arith.constant dense<0.000000e+00> : vector<34x128xf32>
    %42 = tpu.matmul %39, %41, %cst_43 {dimension_numbers = #tpu.dot_dimension_numbers<[1], [0], [0], [1], [0, 0, 1, 1], [], []>} : vector<34x128xf32>, vector<128x128xf32>, vector<34x128xf32> -> vector<34x128xf32>
    %43 = arith.addf %38, %42 : vector<34x128xf32>
    %44 = vector.broadcast %3 : vector<1x128xf32> to vector<34x128xf32>
    %45 = arith.mulf %43, %44 : vector<34x128xf32>
    %46 = vector.broadcast %4 : vector<1x128xf32> to vector<34x128xf32>
    %47 = arith.addf %45, %46 : vector<34x128xf32>
    %cst_44 = arith.constant 0.000000e+00 : f32
    %48 = vector.broadcast %cst_44 : f32 to vector<34x128xf32>
    %49 = arith.maximumf %47, %48 : vector<34x128xf32>
    %c0_45 = arith.constant 0 : index
    %c0_46 = arith.constant 0 : index
    %50 = vector.load %arg11[%c0_45, %c0_46] : memref<36x128xf32, #tpu.memory_space<vmem>>, vector<1x128xf32>
    tpu.vector_store %arg11[%c0_45, %c0_46], %0 {strides = array<i32>} : memref<36x128xf32, #tpu.memory_space<vmem>>, vector<1x128xf32>,
    %51 = vector.extract_strided_slice %49 {offsets = [0, 0], sizes = [16, 128], strides = [1, 1]} : vector<34x128xf32> to vector<16x128xf32>
    %c1_47 = arith.constant 1 : index
    %c0_48 = arith.constant 0 : index
    %52 = vector.load %arg11[%c1_47, %c0_48] : memref<36x128xf32, #tpu.memory_space<vmem>>, vector<16x128xf32>
    tpu.vector_store %arg11[%c1_47, %c0_48], %51 {strides = array<i32>} : memref<36x128xf32, #tpu.memory_space<vmem>>, vector<16x128xf32>,
    %c17_49 = arith.constant 17 : index
    %c0_50 = arith.constant 0 : index
    %53 = vector.load %arg11[%c17_49, %c0_50] : memref<36x128xf32, #tpu.memory_space<vmem>>, vector<1x128xf32>
    tpu.vector_store %arg11[%c17_49, %c0_50], %0 {strides = array<i32>} : memref<36x128xf32, #tpu.memory_space<vmem>>, vector<1x128xf32>,
    %c18_51 = arith.constant 18 : index
    %c0_52 = arith.constant 0 : index
    %54 = vector.load %arg11[%c18_51, %c0_52] : memref<36x128xf32, #tpu.memory_space<vmem>>, vector<1x128xf32>
    tpu.vector_store %arg11[%c18_51, %c0_52], %0 {strides = array<i32>} : memref<36x128xf32, #tpu.memory_space<vmem>>, vector<1x128xf32>,
    %55 = vector.extract_strided_slice %49 {offsets = [18, 0], sizes = [16, 128], strides = [1, 1]} : vector<34x128xf32> to vector<16x128xf32>
    %c19_53 = arith.constant 19 : index
    %c0_54 = arith.constant 0 : index
    %56 = vector.load %arg11[%c19_53, %c0_54] : memref<36x128xf32, #tpu.memory_space<vmem>>, vector<16x128xf32>
    tpu.vector_store %arg11[%c19_53, %c0_54], %55 {strides = array<i32>} : memref<36x128xf32, #tpu.memory_space<vmem>>, vector<16x128xf32>,
    %c35_55 = arith.constant 35 : index
    %c0_56 = arith.constant 0 : index
    %57 = vector.load %arg11[%c35_55, %c0_56] : memref<36x128xf32, #tpu.memory_space<vmem>>, vector<1x128xf32>
    tpu.vector_store %arg11[%c35_55, %c0_56], %0 {strides = array<i32>} : memref<36x128xf32, #tpu.memory_space<vmem>>, vector<1x128xf32>,
    %c0_57 = arith.constant 0 : index
    %c0_58 = arith.constant 0 : index
    %58 = vector.load %arg11[%c0_57, %c0_58] : memref<36x128xf32, #tpu.memory_space<vmem>>, vector<34x128xf32>
    %c0_59 = arith.constant 0 : index
    %c0_60 = arith.constant 0 : index
    %c0_61 = arith.constant 0 : index
    %59 = vector.load %arg7[%c0_59, %c0_60, %c0_61] : memref<3x128x128xf32, #tpu.memory_space<vmem>>, vector<1x128x128xf32>
    %60 = vector.shape_cast %59 : vector<1x128x128xf32> to vector<128x128xf32>
    %cst_62 = arith.constant dense<0.000000e+00> : vector<34x128xf32>
    %61 = tpu.matmul %58, %60, %cst_62 {dimension_numbers = #tpu.dot_dimension_numbers<[1], [0], [0], [1], [0, 0, 1, 1], [], []>} : vector<34x128xf32>, vector<128x128xf32>, vector<34x128xf32> -> vector<34x128xf32>
    %c1_63 = arith.constant 1 : index
    %c0_64 = arith.constant 0 : index
    %62 = vector.load %arg11[%c1_63, %c0_64] : memref<36x128xf32, #tpu.memory_space<vmem>>, vector<34x128xf32>
    %c1_65 = arith.constant 1 : index
    %c0_66 = arith.constant 0 : index
    %c0_67 = arith.constant 0 : index
    %63 = vector.load %arg7[%c1_65, %c0_66, %c0_67] : memref<3x128x128xf32, #tpu.memory_space<vmem>>, vector<1x128x128xf32>
    %64 = vector.shape_cast %63 : vector<1x128x128xf32> to vector<128x128xf32>
    %cst_68 = arith.constant dense<0.000000e+00> : vector<34x128xf32>
    %65 = tpu.matmul %62, %64, %cst_68 {dimension_numbers = #tpu.dot_dimension_numbers<[1], [0], [0], [1], [0, 0, 1, 1], [], []>} : vector<34x128xf32>, vector<128x128xf32>, vector<34x128xf32> -> vector<34x128xf32>
    %66 = arith.addf %61, %65 : vector<34x128xf32>
    %c2_69 = arith.constant 2 : index
    %c0_70 = arith.constant 0 : index
    %67 = vector.load %arg11[%c2_69, %c0_70] : memref<36x128xf32, #tpu.memory_space<vmem>>, vector<34x128xf32>
    %c2_71 = arith.constant 2 : index
    %c0_72 = arith.constant 0 : index
    %c0_73 = arith.constant 0 : index
    %68 = vector.load %arg7[%c2_71, %c0_72, %c0_73] : memref<3x128x128xf32, #tpu.memory_space<vmem>>, vector<1x128x128xf32>
    %69 = vector.shape_cast %68 : vector<1x128x128xf32> to vector<128x128xf32>
    %cst_74 = arith.constant dense<0.000000e+00> : vector<34x128xf32>
    %70 = tpu.matmul %67, %69, %cst_74 {dimension_numbers = #tpu.dot_dimension_numbers<[1], [0], [0], [1], [0, 0, 1, 1], [], []>} : vector<34x128xf32>, vector<128x128xf32>, vector<34x128xf32> -> vector<34x128xf32>
    %71 = arith.addf %66, %70 : vector<34x128xf32>
    %c0_75 = arith.constant 0 : index
    %c0_76 = arith.constant 0 : index
    %72 = vector.load %arg12[%c0_75, %c0_76] : memref<32x128xf32, #tpu.memory_space<vmem>>, vector<32x128xf32>
    %c0_77 = arith.constant 0 : index
    %c0_78 = arith.constant 0 : index
    %73 = vector.load %arg8[%c0_77, %c0_78] : memref<128x128xf32, #tpu.memory_space<vmem>>, vector<128x128xf32>
    %cst_79 = arith.constant dense<0.000000e+00> : vector<32x128xf32>
    %74 = tpu.matmul %72, %73, %cst_79 {dimension_numbers = #tpu.dot_dimension_numbers<[1], [0], [0], [1], [0, 0, 1, 1], [], []>} : vector<32x128xf32>, vector<128x128xf32>, vector<32x128xf32> -> vector<32x128xf32>
    %75 = vector.extract_strided_slice %71 {offsets = [0, 0], sizes = [16, 128], strides = [1, 1]} : vector<34x128xf32> to vector<16x128xf32>
    %76 = vector.extract_strided_slice %74 {offsets = [0, 0], sizes = [16, 128], strides = [1, 1]} : vector<32x128xf32> to vector<16x128xf32>
    %77 = arith.addf %75, %76 : vector<16x128xf32>
    %c0_80 = arith.constant 0 : index
    %c0_81 = arith.constant 0 : index
    %c0_82 = arith.constant 0 : index
    %78 = vector.load %arg9[%c0_80, %c0_81, %c0_82] : memref<2x16x128xf32, #tpu.memory_space<vmem>>, vector<1x16x128xf32>
    %79 = vector.shape_cast %78 : vector<1x16x128xf32> to vector<16x128xf32>
    %80 = vector.shape_cast %77 : vector<16x128xf32> to vector<1x16x128xf32>
    tpu.vector_store %arg9[%c0_80, %c0_81, %c0_82], %80 {strides = array<i32>} : memref<2x16x128xf32, #tpu.memory_space<vmem>>, vector<1x16x128xf32>,
    %81 = vector.extract_strided_slice %71 {offsets = [18, 0], sizes = [16, 128], strides = [1, 1]} : vector<34x128xf32> to vector<16x128xf32>
    %82 = vector.extract_strided_slice %74 {offsets = [16, 0], sizes = [16, 128], strides = [1, 1]} : vector<32x128xf32> to vector<16x128xf32>
    %83 = arith.addf %81, %82 : vector<16x128xf32>
    %c1_83 = arith.constant 1 : index
    %c0_84 = arith.constant 0 : index
    %c0_85 = arith.constant 0 : index
    %84 = vector.load %arg9[%c1_83, %c0_84, %c0_85] : memref<2x16x128xf32, #tpu.memory_space<vmem>>, vector<1x16x128xf32>
    %85 = vector.shape_cast %84 : vector<1x16x128xf32> to vector<16x128xf32>
    %86 = vector.shape_cast %83 : vector<16x128xf32> to vector<1x16x128xf32>
    tpu.vector_store %arg9[%c1_83, %c0_84, %c0_85], %86 {strides = array<i32>} : memref<2x16x128xf32, #tpu.memory_space<vmem>>, vector<1x16x128xf32>,
    return
  }
  func.func @transform_0(%arg0: i32) -> (i32, i32, i32) {
    %c0_i32 = arith.constant 0 : i32
    %c0_i32_0 = arith.constant 0 : i32
    %c0_i32_1 = arith.constant 0 : i32
    return %arg0, %c0_i32, %c0_i32_0 : i32, i32, i32
  }
  func.func @transform_1(%arg0: i32) -> (i32, i32) {
    %c0_i32 = arith.constant 0 : i32
    %c0_i32_0 = arith.constant 0 : i32
    %c0_i32_1 = arith.constant 0 : i32
    return %c0_i32, %c0_i32_0 : i32, i32
  }
  func.func @transform_2(%arg0: i32) -> (i32, i32) {
    %c0_i32 = arith.constant 0 : i32
    %c0_i32_0 = arith.constant 0 : i32
    %c0_i32_1 = arith.constant 0 : i32
    return %c0_i32, %c0_i32_0 : i32, i32
  }
  func.func @transform_3(%arg0: i32) -> (i32, i32, i32) {
    %c0_i32 = arith.constant 0 : i32
    %c0_i32_0 = arith.constant 0 : i32
    %c0_i32_1 = arith.constant 0 : i32
    %c0_i32_2 = arith.constant 0 : i32
    return %c0_i32, %c0_i32_0, %c0_i32_1 : i32, i32, i32
  }
  func.func @transform_4(%arg0: i32) -> (i32, i32) {
    %c0_i32 = arith.constant 0 : i32
    %c0_i32_0 = arith.constant 0 : i32
    %c0_i32_1 = arith.constant 0 : i32
    return %c0_i32, %c0_i32_0 : i32, i32
  }
  func.func @transform_5(%arg0: i32) -> (i32, i32) {
    %c0_i32 = arith.constant 0 : i32
    %c0_i32_0 = arith.constant 0 : i32
    %c0_i32_1 = arith.constant 0 : i32
    return %c0_i32, %c0_i32_0 : i32, i32
  }
  func.func @transform_6(%arg0: i32) -> (i32, i32, i32) {
    %c0_i32 = arith.constant 0 : i32
    %c0_i32_0 = arith.constant 0 : i32
    %c0_i32_1 = arith.constant 0 : i32
    %c0_i32_2 = arith.constant 0 : i32
    return %c0_i32, %c0_i32_0, %c0_i32_1 : i32, i32, i32
  }
  func.func @transform_7(%arg0: i32) -> (i32, i32) {
    %c0_i32 = arith.constant 0 : i32
    %c0_i32_0 = arith.constant 0 : i32
    %c0_i32_1 = arith.constant 0 : i32
    return %c0_i32, %c0_i32_0 : i32, i32
  }
  func.func @transform_8(%arg0: i32) -> (i32, i32, i32) {
    %c0_i32 = arith.constant 0 : i32
    %c0_i32_0 = arith.constant 0 : i32
    %c0_i32_1 = arith.constant 0 : i32
    return %arg0, %c0_i32, %c0_i32_0 : i32, i32, i32
  }
}

</mosaic_0001>

<llo_original>
// kernel: tpu_custom_call.1
$region0: #{tpu_custom_call.1}
  #allocation0 [shape = 'u32[]', space=smem, size = 0x4, offset = 0x4, fixed_abs, tag = 'smem constant byte address 0x4 - core index']
  #allocation1 [shape = 'u32[72,128]{1,0:T(1,128)}', space=vmem, size = 0x9000, scoped, tag = 'internal scratch']
  #allocation2 [shape = 'f32[36,128]{1,0:T(8,128)}', space=vmem, size = 0x5000, scoped, tag = 'scratch operand']
  #allocation3 [shape = 'f32[36,128]{1,0:T(8,128)}', space=vmem, size = 0x5000, scoped, tag = 'scratch operand']
  #allocation4 [shape = 'f32[32,128]{1,0:T(8,128)}', space=vmem, size = 0x4000, scoped, tag = 'scratch operand']
  %s0 = inlined_call_operand.hbm [shape: f32[4,16,128], index: 0, kind: input, shape index: {}]
  %s1 = inlined_call_operand.hbm [shape: f32[1,128], index: 1, kind: input, shape index: {}]
  %s2 = inlined_call_operand.vmem [shape: f32[1,128], index: 2, kind: input, shape index: {}]
  %s3 = inlined_call_operand.hbm [shape: f32[3,128,128], index: 3, kind: input, shape index: {}]
  %s4 = inlined_call_operand.vmem [shape: f32[1,128], index: 4, kind: input, shape index: {}]
  %s5 = inlined_call_operand.vmem [shape: f32[1,128], index: 5, kind: input, shape index: {}]
  %s6 = inlined_call_operand.hbm [shape: f32[3,128,128], index: 6, kind: input, shape index: {}]
  %s7 = inlined_call_operand.hbm [shape: f32[128,128], index: 7, kind: input, shape index: {}]
  %s8 = inlined_call_operand.hbm [shape: f32[4,16,128], index: 8, kind: output, shape index: {}]
  %s9 = sld [smem:[#allocation0]]
  $region85: #{tpu_custom_call.1} parent=0
    _
  %s11 = ssub.s32 1, %s9
  %s12 = scalar_select 0, %s11, %s9
  $region1: #{tpu_custom_call.1} parent=0
    #allocation5 [shape = 'u8[32768]{0}', space=vmem, size = 0x8000, scoped, tag = 'input window, operand 0']
    #allocation6 [shape = 's32[2]{0}', space=sflag, size = 0x8, scoped, tag = 'scoped memory for tpu_custom_call.1']
    #allocation7 [shape = 's32[2]{0}', space=sflag, size = 0x8, scoped, tag = 'scoped memory for tpu_custom_call.1']
    #allocation8 [shape = 'u8[512]{0}', space=vmem, size = 0x400, scoped, tag = 'input window, operand 1, single buffered']
    #allocation9 [shape = 's32[1]{0}', space=sflag, size = 0x4, scoped, tag = 'scoped memory for tpu_custom_call.1']
    #allocation10 [shape = 'u8[196608]{0}', space=vmem, size = 0x30000, scoped, tag = 'input window, operand 3, single buffered']
    #allocation11 [shape = 'u8[196608]{0}', space=vmem, size = 0x30000, scoped, tag = 'input window, operand 6, single buffered']
    #allocation12 [shape = 's32[1]{0}', space=sflag, size = 0x4, scoped, tag = 'scoped memory for tpu_custom_call.1']
    #allocation13 [shape = 'u8[65536]{0}', space=vmem, size = 0x10000, scoped, tag = 'input window, operand 7, single buffered']
    #allocation14 [shape = 'u8[32768]{0}', space=vmem, size = 0x8000, scoped, tag = 'output window, operand 0']
    %13 = vsyncpa [#allocation6], 0
    %s14 = scalar_lea.sflag [#allocation6], 1
    %15 = vsyncpa %s14, 0
    %16 = vsyncpa [#allocation9], 0
    %17 = vsyncpa [#allocation12], 0
    %18 = vsyncpa [#allocation7], 0
    %s19 = scalar_lea.sflag [#allocation7], 1
    %20 = vsyncpa %s19, 0
    loop: start=0, step=1, limit=4
    $region2: #{tpu_custom_call.1} parent=1 // loop_pre_header
      _
    $region3: #{tpu_custom_call.1} parent=1 // loop_header
      %s22 = sphi 0, %s26
      %p23 = scmp.ge.s32.totalorder %s22, 4
      %s32 = sphi 0, %s34
      %s35 = sphi 0, %s32
      %s36 = sphi 0, %s35
      %s52 = sphi 0, %s36
      %s56 = sphi 0, %s56
      %s58 = sphi 0, %s56
      %s59 = sphi 0, %s58
      %s73 = sphi 0, %s59
      %s77 = sphi 0, %s77
      %s79 = sphi 0, %s77
      %s80 = sphi 0, %s79
      %s94 = sphi 0, %s80
      %s98 = sphi 0, %s98
      %s100 = sphi 0, %s98
      %s101 = sphi 0, %s100
      %s115 = sphi 0, %s101
      %s119 = sphi 0, %s119
      %s121 = sphi 0, %s119
      %s122 = sphi 0, %s121
      %s136 = sphi 0, %s122
      %s140 = sphi 0, %s140
      %s142 = sphi 0, %s140
      %s143 = sphi 0, %s142
      %s157 = sphi 0, %s143
      %s161 = sphi 0, %s161
      %s163 = sphi 0, %s161
      %s164 = sphi 0, %s163
      %s178 = sphi 0, %s164
      %s182 = sphi 0, %s182
      %s184 = sphi 0, %s182
      %s185 = sphi 0, %s184
      %s199 = sphi 0, %s185
      %s205 = sphi 0, %s207
      %s208 = sphi 0, %s205
      %s209 = sphi 0, %s208
      %s225 = sphi 0, %s209
    $region4: #{tpu_custom_call.1} parent=1 // loop_header_branch
      %25 = sbr.rel (%p23) target = $region8
    $region5: #{tpu_custom_call.1} parent=1 // loop_body
      %s27 = ssub.s32 %s22, 1
      %s28 = ssub.s32 %s22, 2
      %s29 = sadd.s32 %s22, 1
      %s30 = ssub.s32 %s22, %s29
      %p31 = scmp.eq.s32.totalorder %s30, 0
      %s33 = sadd.s32 %s32, 1
      %s34 = scalar_select %p31, %s32, %s33
      %p37 = pneg %p31
      %p38 = scmp.eq.s32.totalorder %s22, 1
      %p39 = por %p37, %p38
      %p40 = scmp.ne.s32.totalorder %s32, %s35
      %p41 = scmp.eq.s32.totalorder %s22, 0
      %p42 = por %p40, %p41
      %p43 = scmp.ne.s32.totalorder %s32, %s35
      %p44 = scmp.eq.s32.totalorder %s27, 1
      %p45 = por %p43, %p44
      %p46 = scmp.ne.s32.totalorder %s35, %s36
      %p47 = scmp.eq.s32.totalorder %s27, 0
      %p48 = por %p46, %p47
      %p49 = scmp.ne.s32.totalorder %s35, %s36
      %p50 = scmp.eq.s32.totalorder %s28, 1
      %p51 = por %p49, %p50
      %p53 = scmp.ne.s32.totalorder %s36, %s52
      %p54 = scmp.eq.s32.totalorder %s28, 0
      %p55 = por %p53, %p54
      %s57 = sadd.s32 %s56, 1
      %p60 = scmp.eq.s32.totalorder %s22, 1
      %p61 = scmp.ne.s32.totalorder %s56, %s58
      %p62 = scmp.eq.s32.totalorder %s22, 0
      %p63 = por %p61, %p62
      %p64 = scmp.ne.s32.totalorder %s56, %s58
      %p65 = scmp.eq.s32.totalorder %s27, 1
      %p66 = por %p64, %p65
      %p67 = scmp.ne.s32.totalorder %s58, %s59
      %p68 = scmp.eq.s32.totalorder %s27, 0
      %p69 = por %p67, %p68
      %p70 = scmp.ne.s32.totalorder %s58, %s59
      %p71 = scmp.eq.s32.totalorder %s28, 1
      %p72 = por %p70, %p71
      %p74 = scmp.ne.s32.totalorder %s59, %s73
      %p75 = scmp.eq.s32.totalorder %s28, 0
      %p76 = por %p74, %p75
      %s78 = sadd.s32 %s77, 1
      %p81 = scmp.eq.s32.totalorder %s22, 1
      %p82 = scmp.ne.s32.totalorder %s77, %s79
      %p83 = scmp.eq.s32.totalorder %s22, 0
      %p84 = por %p82, %p83
      %p85 = scmp.ne.s32.totalorder %s77, %s79
      %p86 = scmp.eq.s32.totalorder %s27, 1
      %p87 = por %p85, %p86
      %p88 = scmp.ne.s32.totalorder %s79, %s80
      %p89 = scmp.eq.s32.totalorder %s27, 0
      %p90 = por %p88, %p89
      %p91 = scmp.ne.s32.totalorder %s79, %s80
      %p92 = scmp.eq.s32.totalorder %s28, 1
      %p93 = por %p91, %p92
      %p95 = scmp.ne.s32.totalorder %s80, %s94
      %p96 = scmp.eq.s32.totalorder %s28, 0
      %p97 = por %p95, %p96
      %s99 = sadd.s32 %s98, 1
      %p102 = scmp.eq.s32.totalorder %s22, 1
      %p103 = scmp.ne.s32.totalorder %s98, %s100
      %p104 = scmp.eq.s32.totalorder %s22, 0
      %p105 = por %p103, %p104
      %p106 = scmp.ne.s32.totalorder %s98, %s100
      %p107 = scmp.eq.s32.totalorder %s27, 1
      %p108 = por %p106, %p107
      %p109 = scmp.ne.s32.totalorder %s100, %s101
      %p110 = scmp.eq.s32.totalorder %s27, 0
      %p111 = por %p109, %p110
      %p112 = scmp.ne.s32.totalorder %s100, %s101
      %p113 = scmp.eq.s32.totalorder %s28, 1
      %p114 = por %p112, %p113
      %p116 = scmp.ne.s32.totalorder %s101, %s115
      %p117 = scmp.eq.s32.totalorder %s28, 0
      %p118 = por %p116, %p117
      %s120 = sadd.s32 %s119, 1
      %p123 = scmp.eq.s32.totalorder %s22, 1
      %p124 = scmp.ne.s32.totalorder %s119, %s121
      %p125 = scmp.eq.s32.totalorder %s22, 0
      %p126 = por %p124, %p125
      %p127 = scmp.ne.s32.totalorder %s119, %s121
      %p128 = scmp.eq.s32.totalorder %s27, 1
      %p129 = por %p127, %p128
      %p130 = scmp.ne.s32.totalorder %s121, %s122
      %p131 = scmp.eq.s32.totalorder %s27, 0
      %p132 = por %p130, %p131
      %p133 = scmp.ne.s32.totalorder %s121, %s122
      %p134 = scmp.eq.s32.totalorder %s28, 1
      %p135 = por %p133, %p134
      %p137 = scmp.ne.s32.totalorder %s122, %s136
      %p138 = scmp.eq.s32.totalorder %s28, 0
      %p139 = por %p137, %p138
      %s141 = sadd.s32 %s140, 1
      %p144 = scmp.eq.s32.totalorder %s22, 1
      %p145 = scmp.ne.s32.totalorder %s140, %s142
      %p146 = scmp.eq.s32.totalorder %s22, 0
      %p147 = por %p145, %p146
      %p148 = scmp.ne.s32.totalorder %s140, %s142
      %p149 = scmp.eq.s32.totalorder %s27, 1
      %p150 = por %p148, %p149
      %p151 = scmp.ne.s32.totalorder %s142, %s143
      %p152 = scmp.eq.s32.totalorder %s27, 0
      %p153 = por %p151, %p152
      %p154 = scmp.ne.s32.totalorder %s142, %s143
      %p155 = scmp.eq.s32.totalorder %s28, 1
      %p156 = por %p154, %p155
      %p158 = scmp.ne.s32.totalorder %s143, %s157
      %p159 = scmp.eq.s32.totalorder %s28, 0
      %p160 = por %p158, %p159
      %s162 = sadd.s32 %s161, 1
      %p165 = scmp.eq.s32.totalorder %s22, 1
      %p166 = scmp.ne.s32.totalorder %s161, %s163
      %p167 = scmp.eq.s32.totalorder %s22, 0
      %p168 = por %p166, %p167
      %p169 = scmp.ne.s32.totalorder %s161, %s163
      %p170 = scmp.eq.s32.totalorder %s27, 1
      %p171 = por %p169, %p170
      %p172 = scmp.ne.s32.totalorder %s163, %s164
      %p173 = scmp.eq.s32.totalorder %s27, 0
      %p174 = por %p172, %p173
      %p175 = scmp.ne.s32.totalorder %s163, %s164
      %p176 = scmp.eq.s32.totalorder %s28, 1
      %p177 = por %p175, %p176
      %p179 = scmp.ne.s32.totalorder %s164, %s178
      %p180 = scmp.eq.s32.totalorder %s28, 0
      %p181 = por %p179, %p180
      %s183 = sadd.s32 %s182, 1
      %p186 = scmp.eq.s32.totalorder %s22, 1
      %p187 = scmp.ne.s32.totalorder %s182, %s184
      %p188 = scmp.eq.s32.totalorder %s22, 0
      %p189 = por %p187, %p188
      %p190 = scmp.ne.s32.totalorder %s182, %s184
      %p191 = scmp.eq.s32.totalorder %s27, 1
      %p192 = por %p190, %p191
      %p193 = scmp.ne.s32.totalorder %s184, %s185
      %p194 = scmp.eq.s32.totalorder %s27, 0
      %p195 = por %p193, %p194
      %p196 = scmp.ne.s32.totalorder %s184, %s185
      %p197 = scmp.eq.s32.totalorder %s28, 1
      %p198 = por %p196, %p197
      %p200 = scmp.ne.s32.totalorder %s185, %s199
      %p201 = scmp.eq.s32.totalorder %s28, 0
      %p202 = por %p200, %p201
      %s203 = ssub.s32 %s22, %s29
      %p204 = scmp.eq.s32.totalorder %s203, 0
      %s206 = sadd.s32 %s205, 1
      %s207 = scalar_select %p204, %s205, %s206
      %p210 = pneg %p204
      %p211 = scmp.eq.s32.totalorder %s22, 1
      %p212 = por %p210, %p211
      %p213 = scmp.ne.s32.totalorder %s205, %s208
      %p214 = scmp.eq.s32.totalorder %s22, 0
      %p215 = por %p213, %p214
      %p216 = scmp.ne.s32.totalorder %s205, %s208
      %p217 = scmp.eq.s32.totalorder %s27, 1
      %p218 = por %p216, %p217
      %p219 = scmp.ne.s32.totalorder %s208, %s209
      %p220 = scmp.eq.s32.totalorder %s27, 0
      %p221 = por %p219, %p220
      %p222 = scmp.ne.s32.totalorder %s208, %s209
      %p223 = scmp.eq.s32.totalorder %s28, 1
      %p224 = por %p222, %p223
      %p226 = scmp.ne.s32.totalorder %s209, %s225
      %p227 = scmp.eq.s32.totalorder %s28, 0
      %p228 = por %p226, %p227
      %p229 = scmp.le.s32.totalorder 1, %s22
      %p230 = scmp.lt.s32.totalorder %s22, 3
      %p231 = pnand %p229, %p230
      %p232 = pneg %p231
      // Predicated region
      $region9: #{tpu_custom_call.1} parent=5 // pred_check
        _
      $region10: #{tpu_custom_call.1} parent=5 // pred_check_branch
        %234 = sbr.rel (%p231) target = $region12
      $region11: #{tpu_custom_call.1} parent=5 // pred_region
        %s235 = ssub.s32 %s22, 1
        // Predicated region
        $region13: #{tpu_custom_call.1} parent=11 // pred_check
          %p236 = pneg %p69
        $region14: #{tpu_custom_call.1} parent=11 // pred_check_branch
          %238 = sbr.rel (%p236) target = $region16
        $region15: #{tpu_custom_call.1} parent=11 // pred_region
          %240 = vsyncadd [#allocation9], 0
          %s242 = sshll.u32 %s1, 4
          %s243 = int_to_ptr.hbm [resolvable:$true] %s242
          %s244 = sshll.u32 [#allocation8], 4
          %s245 = int_to_ptr.vmem [resolvable:$true] %s244
          %247 = dma.hbm_to_vmem [thread:$0]  %s243, 16, %s245, [#allocation9]
        $region16: #{tpu_custom_call.1} parent=11 // pred_fallthru
          _
        // Predicated region
        $region17: #{tpu_custom_call.1} parent=11 // pred_check
          %p248 = pneg %p90
        $region18: #{tpu_custom_call.1} parent=11 // pred_check_branch
          %250 = sbr.rel (%p248) target = $region20
        $region19: #{tpu_custom_call.1} parent=11 // pred_region
          _
        $region20: #{tpu_custom_call.1} parent=11 // pred_fallthru
          _
        // Predicated region
        $region21: #{tpu_custom_call.1} parent=11 // pred_check
          %p251 = pneg %p111
        $region22: #{tpu_custom_call.1} parent=11 // pred_check_branch
          %253 = sbr.rel (%p251) target = $region24
        $region23: #{tpu_custom_call.1} parent=11 // pred_region
          %255 = vsyncadd [#allocation9], 0
          %s256 = sshll.u32 %s3, 4
          %s257 = int_to_ptr.hbm [resolvable:$true] %s256
          %s258 = sshll.u32 [#allocation10], 4
          %s259 = int_to_ptr.vmem [resolvable:$true] %s258
          %264 = dma.hbm_to_vmem [thread:$0]  %s257, 6144, %s259, [#allocation9], 128, 128, 8
        $region24: #{tpu_custom_call.1} parent=11 // pred_fallthru
          _
        // Predicated region
        $region25: #{tpu_custom_call.1} parent=11 // pred_check
          %p265 = pneg %p132
        $region26: #{tpu_custom_call.1} parent=11 // pred_check_branch
          %267 = sbr.rel (%p265) target = $region28
        $region27: #{tpu_custom_call.1} parent=11 // pred_region
          _
        $region28: #{tpu_custom_call.1} parent=11 // pred_fallthru
          _
        // Predicated region
        $region29: #{tpu_custom_call.1} parent=11 // pred_check
          %p268 = pneg %p153
        $region30: #{tpu_custom_call.1} parent=11 // pred_check_branch
          %270 = sbr.rel (%p268) target = $region32
        $region31: #{tpu_custom_call.1} parent=11 // pred_region
          _
        $region32: #{tpu_custom_call.1} parent=11 // pred_fallthru
          _
        // Predicated region
        $region33: #{tpu_custom_call.1} parent=11 // pred_check
          %p271 = pneg %p174
        $region34: #{tpu_custom_call.1} parent=11 // pred_check_branch
          %273 = sbr.rel (%p271) target = $region36
        $region35: #{tpu_custom_call.1} parent=11 // pred_region
          %275 = vsyncadd [#allocation12], 0
          %s276 = sshll.u32 %s6, 4
          %s277 = int_to_ptr.hbm [resolvable:$true] %s276
          %s278 = sshll.u32 [#allocation11], 4
          %s279 = int_to_ptr.vmem [resolvable:$true] %s278
          %284 = dma.hbm_to_vmem [thread:$0]  %s277, 6144, %s279, [#allocation12], 128, 128, 8
        $region36: #{tpu_custom_call.1} parent=11 // pred_fallthru
          _
        // Predicated region
        $region37: #{tpu_custom_call.1} parent=11 // pred_check
          %p285 = pneg %p195
        $region38: #{tpu_custom_call.1} parent=11 // pred_check_branch
          %287 = sbr.rel (%p285) target = $region40
        $region39: #{tpu_custom_call.1} parent=11 // pred_region
          %289 = vsyncadd [#allocation12], 0
          %s290 = sshll.u32 %s7, 4
          %s291 = int_to_ptr.hbm [resolvable:$true] %s290
          %s292 = sshll.u32 [#allocation13], 4
          %s293 = int_to_ptr.vmem [resolvable:$true] %s292
          %298 = dma.hbm_to_vmem [thread:$0]  %s291, 2048, %s293, [#allocation12], 128, 128, 8
        $region40: #{tpu_custom_call.1} parent=11 // pred_fallthru
          _
      $region12: #{tpu_custom_call.1} parent=5 // pred_fallthru
        _
      %p299 = scmp.lt.s32.totalorder %s22, 2
      // Predicated region
      $region41: #{tpu_custom_call.1} parent=5 // pred_check
        %p300 = pneg %p299
      $region42: #{tpu_custom_call.1} parent=5 // pred_check_branch
        %302 = sbr.rel (%p300) target = $region44
      $region43: #{tpu_custom_call.1} parent=5 // pred_region
        // Predicated region
        $region45: #{tpu_custom_call.1} parent=43 // pred_check
          %p303 = pneg %p42
        $region46: #{tpu_custom_call.1} parent=43 // pred_check_branch
          %305 = sbr.rel (%p303) target = $region48
        $region47: #{tpu_custom_call.1} parent=43 // pred_region
          %s306 = sand.u32 %s32, 1
          %s307 = scalar_lea.sflag [#allocation6], %s306
          %s308 = sand.u32 %s32, 1
          %s309 = smul.addr %s308, 32
          %s310 = scalar_lea.vmem [#allocation5], %s309
          %s311 = smul.u32 2, %s22
          %313 = vsyncadd %s307, 0
          %s314 = smul.addr %s311, 2
          %s315 = smul.addr %s314, 8
          %s316 = scalar_lea.hbm %s0, %s315
          %s317 = sshll.u32 %s316, 4
          %s318 = int_to_ptr.hbm [resolvable:$true] %s317
          %s319 = sshll.u32 %s310, 4
          %s320 = int_to_ptr.vmem [resolvable:$true] %s319
          %325 = dma.hbm_to_vmem [thread:$0]  %s318, 512, %s320, %s307, 128, 128, 8
        $region48: #{tpu_custom_call.1} parent=43 // pred_fallthru
          _
      $region44: #{tpu_custom_call.1} parent=5 // pred_fallthru
        _
      %p326 = scmp.le.s32.totalorder 1, %s22
      %p327 = scmp.lt.s32.totalorder %s22, 3
      %p328 = pnand %p326, %p327
      %p329 = pneg %p328
      // Predicated region
      $region49: #{tpu_custom_call.1} parent=5 // pred_check
        _
      $region50: #{tpu_custom_call.1} parent=5 // pred_check_branch
        %331 = sbr.rel (%p328) target = $region52
      $region51: #{tpu_custom_call.1} parent=5 // pred_region
        %s332 = ssub.s32 %s22, 1
        %s333 = sand.u32 %s35, 1
        %s334 = scalar_lea.sflag [#allocation6], %s333
        %s335 = sand.u32 %s35, 1
        %s336 = smul.addr %s335, 32
        %s337 = scalar_lea.vmem [#allocation5], %s336
        // Predicated region
        $region53: #{tpu_custom_call.1} parent=51 // pred_check
          %p338 = pneg %p48
        $region54: #{tpu_custom_call.1} parent=51 // pred_check_branch
          %340 = sbr.rel (%p338) target = $region56
        $region55: #{tpu_custom_call.1} parent=51 // pred_region
          %342 = dma.done %s334, 512
        $region56: #{tpu_custom_call.1} parent=51 // pred_fallthru
          _
        // Predicated region
        $region57: #{tpu_custom_call.1} parent=51 // pred_check
          %p343 = pneg %p69
        $region58: #{tpu_custom_call.1} parent=51 // pred_check_branch
          %345 = sbr.rel (%p343) target = $region60
        $region59: #{tpu_custom_call.1} parent=51 // pred_region
          %347 = dma.done [#allocation9], 16
        $region60: #{tpu_custom_call.1} parent=51 // pred_fallthru
          _
        // Predicated region
        $region61: #{tpu_custom_call.1} parent=51 // pred_check
          %p348 = pneg %p111
        $region62: #{tpu_custom_call.1} parent=51 // pred_check_branch
          %350 = sbr.rel (%p348) target = $region64
        $region63: #{tpu_custom_call.1} parent=51 // pred_region
          %352 = dma.done [#allocation9], 6144
        $region64: #{tpu_custom_call.1} parent=51 // pred_fallthru
          _
        // Predicated region
        $region65: #{tpu_custom_call.1} parent=51 // pred_check
          %p353 = pneg %p174
        $region66: #{tpu_custom_call.1} parent=51 // pred_check_branch
          %355 = sbr.rel (%p353) target = $region68
        $region67: #{tpu_custom_call.1} parent=51 // pred_region
          %357 = dma.done [#allocation12], 6144
        $region68: #{tpu_custom_call.1} parent=51 // pred_fallthru
          _
        // Predicated region
        $region69: #{tpu_custom_call.1} parent=51 // pred_check
          %p358 = pneg %p195
        $region70: #{tpu_custom_call.1} parent=51 // pred_check_branch
          %360 = sbr.rel (%p358) target = $region72
        $region71: #{tpu_custom_call.1} parent=51 // pred_region
          %362 = dma.done [#allocation12], 2048
        $region72: #{tpu_custom_call.1} parent=51 // pred_fallthru
          _
        %s363 = sand.u32 %s35, 1
        %s364 = scalar_lea.sflag [#allocation6], %s363
        %s365 = sand.u32 %s35, 1
        %s366 = smul.addr %s365, 32
        %s367 = scalar_lea.vmem [#allocation5], %s366
        %p368 = pneg %p48
        %p369 = pneg %p45
        %p370 = pneg %p69
        %p371 = pneg %p66
        %p372 = pneg %p90
        %p373 = pneg %p87
        %p374 = pneg %p111
        %p375 = pneg %p108
        %p376 = pneg %p132
        %p377 = pneg %p129
        %p378 = pneg %p153
        %p379 = pneg %p150
        %p380 = pneg %p174
        %p381 = pneg %p171
        %p382 = pneg %p195
        %p383 = pneg %p192
        %p384 = pneg %p221
        %p385 = pneg %p218
        %s386 = sand.u32 %s208, 1
        %s387 = scalar_lea.sflag [#allocation7], %s386
        %s388 = sand.u32 %s208, 1
        %s389 = smul.addr %s388, 32
        %s390 = scalar_lea.vmem [#allocation14], %s389
        %s391 = smul.u32 2, %s27
        %s392 = smul.u32 2, %s27
        %v393 = vld [vmem:[#allocation8] sm:$0x1]
        %v394 = vld [vmem:[%s2] sm:$0x1]
        %v395 = vld [vmem:[%s4] sm:$0x1]
        %v396 = vld [vmem:[%s5] sm:$0x1]
        %v397 = vld [vmem:[%s337] sm:$0xff]
        %v398 = vld [vmem:[%s337 + $0x8] sm:$0xff]
        %v399 = vld [vmem:[%s337 + $0x10] sm:$0xff]
        %v400 = vld [vmem:[%s337 + $0x18] sm:$0xff]
        %v402 = vperm.slane %v393, 0
        %v404 = vmul.f32 %v397, %v402
        %v405 = vmul.f32 %v398, %v402
        %v406 = vmul.f32 %v399, %v402
        %v407 = vmul.f32 %v400, %v402
        %v409 = vperm.slane %v394, 0
        %v411 = vadd.f32 %v404, %v409
        %v412 = vadd.f32 %v405, %v409
        %v413 = vadd.f32 %v406, %v409
        %v414 = vadd.f32 %v407, %v409
        %v415 = vmax.f32 %v411, 0.0
        %v416 = vmax.f32 %v412, 0.0
        %v417 = vmax.f32 %v413, 0.0
        %v418 = vmax.f32 %v414, 0.0
        %419 = vst [vmem:[#allocation2] sm:$0x1] 0.0
        %420 = vst [vmem:[#allocation2 + $0x1] sm:$0xff] %v415
        %421 = vst [vmem:[#allocation2 + $0x9] sm:$0xff] %v416
        %422 = vst [vmem:[#allocation2 + $0x11] sm:$0x1] 0.0
        %v423 = vld [vmem:[%s337] sm:$0xff]
        %v424 = vld [vmem:[%s337 + $0x8] sm:$0xff]
        %425 = vst [vmem:[#allocation4] sm:$0xff] %v423
        %426 = vst [vmem:[#allocation4 + $0x8] sm:$0xff] %v424
        %427 = vst [vmem:[#allocation2 + $0x12] sm:$0x1] 0.0
        %428 = vst [vmem:[#allocation2 + $0x13] sm:$0xff] %v417
        %429 = vst [vmem:[#allocation2 + $0x1b] sm:$0xff] %v418
        %430 = vst [vmem:[#allocation2 + $0x23] sm:$0x1] 0.0
        %s431 = scalar_lea.vmem %s337, 16 [#allocation5]
        %v432 = vld [vmem:[%s431] sm:$0xff]
        %v433 = vld [vmem:[%s431 + $0x8] sm:$0xff]
        %434 = vst [vmem:[#allocation4 + $0x10] sm:$0xff] %v432
        %435 = vst [vmem:[#allocation4 + $0x18] sm:$0xff] %v433
        %v436 = vld [vmem:[#allocation2] sm:$0xff]
        %v437 = vld [vmem:[#allocation2 + $0x8] sm:$0xff]
        %v438 = vld [vmem:[#allocation2 + $0x10] sm:$0xff]
        %v439 = vld [vmem:[#allocation2 + $0x18] sm:$0xff]
        %v440 = vld [vmem:[#allocation2 + $0x20] sm:$0x3]
        %v441 = vld [vmem:[#allocation10] sm:$0xff]
        %v442 = vld [vmem:[#allocation10 + $0x8] sm:$0xff]
        %v443 = vld [vmem:[#allocation10 + $0x10] sm:$0xff]
        %v444 = vld [vmem:[#allocation10 + $0x18] sm:$0xff]
        %v445 = vld [vmem:[#allocation10 + $0x20] sm:$0xff]
        %v446 = vld [vmem:[#allocation10 + $0x28] sm:$0xff]
        %v447 = vld [vmem:[#allocation10 + $0x30] sm:$0xff]
        %v448 = vld [vmem:[#allocation10 + $0x38] sm:$0xff]
        %v449 = vld [vmem:[#allocation10 + $0x40] sm:$0xff]
        %v450 = vld [vmem:[#allocation10 + $0x48] sm:$0xff]
        %v451 = vld [vmem:[#allocation10 + $0x50] sm:$0xff]
        %v452 = vld [vmem:[#allocation10 + $0x58] sm:$0xff]
        %v453 = vld [vmem:[#allocation10 + $0x60] sm:$0xff]
        %v454 = vld [vmem:[#allocation10 + $0x68] sm:$0xff]
        %v455 = vld [vmem:[#allocation10 + $0x70] sm:$0xff]
        %v456 = vld [vmem:[#allocation10 + $0x78] sm:$0xff]
        %v457 = vld [vmem:[#allocation2 + $0x1] sm:$0xff]
        %v458 = vld [vmem:[#allocation2 + $0x9] sm:$0xff]
        %v459 = vld [vmem:[#allocation2 + $0x11] sm:$0xff]
        %v460 = vld [vmem:[#allocation2 + $0x19] sm:$0xff]
        %v461 = vld [vmem:[#allocation2 + $0x21] sm:$0x3]
        %s462 = scalar_lea.vmem [#allocation10], 128
        %v463 = vld [vmem:[%s462] sm:$0xff]
        %v464 = vld [vmem:[%s462 + $0x8] sm:$0xff]
        %v465 = vld [vmem:[%s462 + $0x10] sm:$0xff]
        %v466 = vld [vmem:[%s462 + $0x18] sm:$0xff]
        %v467 = vld [vmem:[%s462 + $0x20] sm:$0xff]
        %v468 = vld [vmem:[%s462 + $0x28] sm:$0xff]
        %v469 = vld [vmem:[%s462 + $0x30] sm:$0xff]
        %v470 = vld [vmem:[%s462 + $0x38] sm:$0xff]
        %v471 = vld [vmem:[%s462 + $0x40] sm:$0xff]
        %v472 = vld [vmem:[%s462 + $0x48] sm:$0xff]
        %v473 = vld [vmem:[%s462 + $0x50] sm:$0xff]
        %v474 = vld [vmem:[%s462 + $0x58] sm:$0xff]
        %v475 = vld [vmem:[%s462 + $0x60] sm:$0xff]
        %v476 = vld [vmem:[%s462 + $0x68] sm:$0xff]
        %v477 = vld [vmem:[%s462 + $0x70] sm:$0xff]
        %v478 = vld [vmem:[%s462 + $0x78] sm:$0xff]
        %479 = vmatpush.msra.mxu0 %v478
        %480 = vmatpush.msra.mxu0 %v477
        %481 = vmatpush.msra.mxu0 %v476
        %482 = vmatpush.msra.mxu0 %v475
        %483 = vmatpush.msra.mxu0 %v474
        %484 = vmatpush.msra.mxu0 %v473
        %485 = vmatpush.msra.mxu0 %v472
        %486 = vmatpush.msra.mxu0 %v471
        %487 = vmatpush.msra.mxu0 %v470
        %488 = vmatpush.msra.mxu0 %v469
        %489 = vmatpush.msra.mxu0 %v468
        %490 = vmatpush.msra.mxu0 %v467
        %491 = vmatpush.msra.mxu0 %v466
        %492 = vmatpush.msra.mxu0 %v465
        %493 = vmatpush.msra.mxu0 %v464
        %494 = vmatpush.msra.mxu0 %v463
        %495 = vmatmul.f32.gmra.mxu0 %v457
        %v496 = vpop.f32.mrf.mxu0
        %v497 = vadd.f32 0.0, %v496
        %498 = vmatmul.f32.gmra.mxu0 %v458
        %v499 = vpop.f32.mrf.mxu0
        %v500 = vadd.f32 0.0, %v499
        %501 = vmatmul.f32.gmra.mxu0 %v459
        %v502 = vpop.f32.mrf.mxu0
        %v503 = vadd.f32 0.0, %v502
        %504 = vmatmul.f32.gmra.mxu0 %v460
        %v505 = vpop.f32.mrf.mxu0
        %v506 = vadd.f32 0.0, %v505
        %507 = vmatmul.f32.gmra.mxu0 %v461
        %v508 = vpop.f32.mrf.mxu0
        %v509 = vadd.f32 0.0, %v508
        %510 = vdwg.mxu0
        %511 = vmatpush.msra.mxu0 %v456
        %512 = vmatpush.msra.mxu0 %v455
        %513 = vmatpush.msra.mxu0 %v454
        %514 = vmatpush.msra.mxu0 %v453
        %515 = vmatpush.msra.mxu0 %v452
        %516 = vmatpush.msra.mxu0 %v451
        %517 = vmatpush.msra.mxu0 %v450
        %518 = vmatpush.msra.mxu0 %v449
        %519 = vmatpush.msra.mxu0 %v448
        %520 = vmatpush.msra.mxu0 %v447
        %521 = vmatpush.msra.mxu0 %v446
        %522 = vmatpush.msra.mxu0 %v445
        %523 = vmatpush.msra.mxu0 %v444
        %524 = vmatpush.msra.mxu0 %v443
        %525 = vmatpush.msra.mxu0 %v442
        %526 = vmatpush.msra.mxu0 %v441
        %527 = vmatmul.f32.gmra.mxu0 %v436
        %v528 = vpop.f32.mrf.mxu0
        %v529 = vadd.f32 %v497, %v528
        %530 = vmatmul.f32.gmra.mxu0 %v437
        %v531 = vpop.f32.mrf.mxu0
        %v532 = vadd.f32 %v500, %v531
        %533 = vmatmul.f32.gmra.mxu0 %v438
        %v534 = vpop.f32.mrf.mxu0
        %v535 = vadd.f32 %v503, %v534
        %536 = vmatmul.f32.gmra.mxu0 %v439
        %v537 = vpop.f32.mrf.mxu0
        %v538 = vadd.f32 %v506, %v537
        %539 = vmatmul.f32.gmra.mxu0 %v440
        %v540 = vpop.f32.mrf.mxu0
        %v541 = vadd.f32 %v509, %v540
        %542 = vdwg.mxu0
        %v543 = vld [vmem:[#allocation2 + $0x2] sm:$0xff]
        %v544 = vld [vmem:[#allocation2 + $0xa] sm:$0xff]
        %v545 = vld [vmem:[#allocation2 + $0x12] sm:$0xff]
        %v546 = vld [vmem:[#allocation2 + $0x1a] sm:$0xff]
        %v547 = vld [vmem:[#allocation2 + $0x22] sm:$0x3]
        %s548 = scalar_lea.vmem [#allocation10], 256
        %v549 = vld [vmem:[%s548] sm:$0xff]
        %v550 = vld [vmem:[%s548 + $0x8] sm:$0xff]
        %v551 = vld [vmem:[%s548 + $0x10] sm:$0xff]
        %v552 = vld [vmem:[%s548 + $0x18] sm:$0xff]
        %v553 = vld [vmem:[%s548 + $0x20] sm:$0xff]
        %v554 = vld [vmem:[%s548 + $0x28] sm:$0xff]
        %v555 = vld [vmem:[%s548 + $0x30] sm:$0xff]
        %v556 = vld [vmem:[%s548 + $0x38] sm:$0xff]
        %v557 = vld [vmem:[%s548 + $0x40] sm:$0xff]
        %v558 = vld [vmem:[%s548 + $0x48] sm:$0xff]
        %v559 = vld [vmem:[%s548 + $0x50] sm:$0xff]
        %v560 = vld [vmem:[%s548 + $0x58] sm:$0xff]
        %v561 = vld [vmem:[%s548 + $0x60] sm:$0xff]
        %v562 = vld [vmem:[%s548 + $0x68] sm:$0xff]
        %v563 = vld [vmem:[%s548 + $0x70] sm:$0xff]
        %v564 = vld [vmem:[%s548 + $0x78] sm:$0xff]
        %565 = vmatpush.msra.mxu0 %v564
        %566 = vmatpush.msra.mxu0 %v563
        %567 = vmatpush.msra.mxu0 %v562
        %568 = vmatpush.msra.mxu0 %v561
        %569 = vmatpush.msra.mxu0 %v560
        %570 = vmatpush.msra.mxu0 %v559
        %571 = vmatpush.msra.mxu0 %v558
        %572 = vmatpush.msra.mxu0 %v557
        %573 = vmatpush.msra.mxu0 %v556
        %574 = vmatpush.msra.mxu0 %v555
        %575 = vmatpush.msra.mxu0 %v554
        %576 = vmatpush.msra.mxu0 %v553
        %577 = vmatpush.msra.mxu0 %v552
        %578 = vmatpush.msra.mxu0 %v551
        %579 = vmatpush.msra.mxu0 %v550
        %580 = vmatpush.msra.mxu0 %v549
        %581 = vmatmul.f32.gmra.mxu0 %v543
        %v582 = vpop.f32.mrf.mxu0
        %v583 = vadd.f32 0.0, %v582
        %584 = vmatmul.f32.gmra.mxu0 %v544
        %v585 = vpop.f32.mrf.mxu0
        %v586 = vadd.f32 0.0, %v585
        %587 = vmatmul.f32.gmra.mxu0 %v545
        %v588 = vpop.f32.mrf.mxu0
        %v589 = vadd.f32 0.0, %v588
        %590 = vmatmul.f32.gmra.mxu0 %v546
        %v591 = vpop.f32.mrf.mxu0
        %v592 = vadd.f32 0.0, %v591
        %593 = vmatmul.f32.gmra.mxu0 %v547
        %v594 = vpop.f32.mrf.mxu0
        %v595 = vadd.f32 0.0, %v594
        %596 = vdwg.mxu0
        %v597 = vadd.f32 %v529, %v583
        %v598 = vadd.f32 %v532, %v586
        %v599 = vadd.f32 %v535, %v589
        %v600 = vadd.f32 %v538, %v592
        %v601 = vadd.f32 %v541, %v595
        %v603 = vperm.slane %v395, 0
        %v605 = vmul.f32 %v597, %v603
        %v606 = vmul.f32 %v598, %v603
        %v607 = vmul.f32 %v599, %v603
        %v608 = vmul.f32 %v600, %v603
        %v609 = vmul.f32 %v601, %v603
        %v611 = vperm.slane %v396, 0
        %v613 = vadd.f32 %v605, %v611
        %v614 = vadd.f32 %v606, %v611
        %v615 = vadd.f32 %v607, %v611
        %v616 = vadd.f32 %v608, %v611
        %v617 = vadd.f32 %v609, %v611
        %v618 = vmax.f32 %v613, 0.0
        %v619 = vmax.f32 %v614, 0.0
        %v620 = vmax.f32 %v615, 0.0
        %v621 = vmax.f32 %v616, 0.0
        %v622 = vmax.f32 %v617, 0.0
        %623 = vst [vmem:[#allocation3] sm:$0x1] 0.0
        %624 = vst [vmem:[#allocation3 + $0x1] sm:$0xff] %v618
        %625 = vst [vmem:[#allocation3 + $0x9] sm:$0xff] %v619
        %626 = vst [vmem:[#allocation3 + $0x11] sm:$0x1] 0.0
        %627 = vst [vmem:[#allocation3 + $0x12] sm:$0x1] 0.0
        %628 = vst [vmem:[#allocation3 + $0x11] sm:$0xfc] %v620
        %629 = vst [vmem:[#allocation3 + $0x19] sm:$0xff] %v621
        %630 = vst [vmem:[#allocation3 + $0x21] sm:$0x3] %v622
        %631 = vst [vmem:[#allocation3 + $0x23] sm:$0x1] 0.0
        %v632 = vld [vmem:[#allocation3] sm:$0xff]
        %v633 = vld [vmem:[#allocation3 + $0x8] sm:$0xff]
        %v634 = vld [vmem:[#allocation3 + $0x10] sm:$0xff]
        %v635 = vld [vmem:[#allocation3 + $0x18] sm:$0xff]
        %v636 = vld [vmem:[#allocation3 + $0x20] sm:$0x3]
        %v637 = vld [vmem:[#allocation11] sm:$0xff]
        %v638 = vld [vmem:[#allocation11 + $0x8] sm:$0xff]
        %v639 = vld [vmem:[#allocation11 + $0x10] sm:$0xff]
        %v640 = vld [vmem:[#allocation11 + $0x18] sm:$0xff]
        %v641 = vld [vmem:[#allocation11 + $0x20] sm:$0xff]
        %v642 = vld [vmem:[#allocation11 + $0x28] sm:$0xff]
        %v643 = vld [vmem:[#allocation11 + $0x30] sm:$0xff]
        %v644 = vld [vmem:[#allocation11 + $0x38] sm:$0xff]
        %v645 = vld [vmem:[#allocation11 + $0x40] sm:$0xff]
        %v646 = vld [vmem:[#allocation11 + $0x48] sm:$0xff]
        %v647 = vld [vmem:[#allocation11 + $0x50] sm:$0xff]
        %v648 = vld [vmem:[#allocation11 + $0x58] sm:$0xff]
        %v649 = vld [vmem:[#allocation11 + $0x60] sm:$0xff]
        %v650 = vld [vmem:[#allocation11 + $0x68] sm:$0xff]
        %v651 = vld [vmem:[#allocation11 + $0x70] sm:$0xff]
        %v652 = vld [vmem:[#allocation11 + $0x78] sm:$0xff]
        %v653 = vld [vmem:[#allocation3 + $0x1] sm:$0xff]
        %v654 = vld [vmem:[#allocation3 + $0x9] sm:$0xff]
        %v655 = vld [vmem:[#allocation3 + $0x11] sm:$0xff]
        %v656 = vld [vmem:[#allocation3 + $0x19] sm:$0xff]
        %v657 = vld [vmem:[#allocation3 + $0x21] sm:$0x3]
        %s658 = scalar_lea.vmem [#allocation11], 128
        %v659 = vld [vmem:[%s658] sm:$0xff]
        %v660 = vld [vmem:[%s658 + $0x8] sm:$0xff]
        %v661 = vld [vmem:[%s658 + $0x10] sm:$0xff]
        %v662 = vld [vmem:[%s658 + $0x18] sm:$0xff]
        %v663 = vld [vmem:[%s658 + $0x20] sm:$0xff]
        %v664 = vld [vmem:[%s658 + $0x28] sm:$0xff]
        %v665 = vld [vmem:[%s658 + $0x30] sm:$0xff]
        %v666 = vld [vmem:[%s658 + $0x38] sm:$0xff]
        %v667 = vld [vmem:[%s658 + $0x40] sm:$0xff]
        %v668 = vld [vmem:[%s658 + $0x48] sm:$0xff]
        %v669 = vld [vmem:[%s658 + $0x50] sm:$0xff]
        %v670 = vld [vmem:[%s658 + $0x58] sm:$0xff]
        %v671 = vld [vmem:[%s658 + $0x60] sm:$0xff]
        %v672 = vld [vmem:[%s658 + $0x68] sm:$0xff]
        %v673 = vld [vmem:[%s658 + $0x70] sm:$0xff]
        %v674 = vld [vmem:[%s658 + $0x78] sm:$0xff]
        %675 = vmatpush.msra.mxu0 %v674
        %676 = vmatpush.msra.mxu0 %v673
        %677 = vmatpush.msra.mxu0 %v672
        %678 = vmatpush.msra.mxu0 %v671
        %679 = vmatpush.msra.mxu0 %v670
        %680 = vmatpush.msra.mxu0 %v669
        %681 = vmatpush.msra.mxu0 %v668
        %682 = vmatpush.msra.mxu0 %v667
        %683 = vmatpush.msra.mxu0 %v666
        %684 = vmatpush.msra.mxu0 %v665
        %685 = vmatpush.msra.mxu0 %v664
        %686 = vmatpush.msra.mxu0 %v663
        %687 = vmatpush.msra.mxu0 %v662
        %688 = vmatpush.msra.mxu0 %v661
        %689 = vmatpush.msra.mxu0 %v660
        %690 = vmatpush.msra.mxu0 %v659
        %691 = vmatmul.f32.gmra.mxu0 %v653
        %v692 = vpop.f32.mrf.mxu0
        %v693 = vadd.f32 0.0, %v692
        %694 = vmatmul.f32.gmra.mxu0 %v654
        %v695 = vpop.f32.mrf.mxu0
        %v696 = vadd.f32 0.0, %v695
        %697 = vmatmul.f32.gmra.mxu0 %v655
        %v698 = vpop.f32.mrf.mxu0
        %v699 = vadd.f32 0.0, %v698
        %700 = vmatmul.f32.gmra.mxu0 %v656
        %v701 = vpop.f32.mrf.mxu0
        %v702 = vadd.f32 0.0, %v701
        %703 = vmatmul.f32.gmra.mxu0 %v657
        %v704 = vpop.f32.mrf.mxu0
        %v705 = vadd.f32 0.0, %v704
        %706 = vdwg.mxu0
        %707 = vmatpush.msra.mxu0 %v652
        %708 = vmatpush.msra.mxu0 %v651
        %709 = vmatpush.msra.mxu0 %v650
        %710 = vmatpush.msra.mxu0 %v649
        %711 = vmatpush.msra.mxu0 %v648
        %712 = vmatpush.msra.mxu0 %v647
        %713 = vmatpush.msra.mxu0 %v646
        %714 = vmatpush.msra.mxu0 %v645
        %715 = vmatpush.msra.mxu0 %v644
        %716 = vmatpush.msra.mxu0 %v643
        %717 = vmatpush.msra.mxu0 %v642
        %718 = vmatpush.msra.mxu0 %v641
        %719 = vmatpush.msra.mxu0 %v640
        %720 = vmatpush.msra.mxu0 %v639
        %721 = vmatpush.msra.mxu0 %v638
        %722 = vmatpush.msra.mxu0 %v637
        %723 = vmatmul.f32.gmra.mxu0 %v632
        %v724 = vpop.f32.mrf.mxu0
        %v725 = vadd.f32 %v693, %v724
        %726 = vmatmul.f32.gmra.mxu0 %v633
        %v727 = vpop.f32.mrf.mxu0
        %v728 = vadd.f32 %v696, %v727
        %729 = vmatmul.f32.gmra.mxu0 %v634
        %v730 = vpop.f32.mrf.mxu0
        %v731 = vadd.f32 %v699, %v730
        %732 = vmatmul.f32.gmra.mxu0 %v635
        %v733 = vpop.f32.mrf.mxu0
        %v734 = vadd.f32 %v702, %v733
        %735 = vmatmul.f32.gmra.mxu0 %v636
        %v736 = vpop.f32.mrf.mxu0
        %v737 = vadd.f32 %v705, %v736
        %738 = vdwg.mxu0
        %v739 = vld [vmem:[#allocation3 + $0x2] sm:$0xff]
        %v740 = vld [vmem:[#allocation3 + $0xa] sm:$0xff]
        %v741 = vld [vmem:[#allocation3 + $0x12] sm:$0xff]
        %v742 = vld [vmem:[#allocation3 + $0x1a] sm:$0xff]
        %v743 = vld [vmem:[#allocation3 + $0x22] sm:$0x3]
        %s744 = scalar_lea.vmem [#allocation11], 256
        %v745 = vld [vmem:[%s744] sm:$0xff]
        %v746 = vld [vmem:[%s744 + $0x8] sm:$0xff]
        %v747 = vld [vmem:[%s744 + $0x10] sm:$0xff]
        %v748 = vld [vmem:[%s744 + $0x18] sm:$0xff]
        %v749 = vld [vmem:[%s744 + $0x20] sm:$0xff]
        %v750 = vld [vmem:[%s744 + $0x28] sm:$0xff]
        %v751 = vld [vmem:[%s744 + $0x30] sm:$0xff]
        %v752 = vld [vmem:[%s744 + $0x38] sm:$0xff]
        %v753 = vld [vmem:[%s744 + $0x40] sm:$0xff]
        %v754 = vld [vmem:[%s744 + $0x48] sm:$0xff]
        %v755 = vld [vmem:[%s744 + $0x50] sm:$0xff]
        %v756 = vld [vmem:[%s744 + $0x58] sm:$0xff]
        %v757 = vld [vmem:[%s744 + $0x60] sm:$0xff]
        %v758 = vld [vmem:[%s744 + $0x68] sm:$0xff]
        %v759 = vld [vmem:[%s744 + $0x70] sm:$0xff]
        %v760 = vld [vmem:[%s744 + $0x78] sm:$0xff]
        %761 = vmatpush.msra.mxu0 %v760
        %762 = vmatpush.msra.mxu0 %v759
        %763 = vmatpush.msra.mxu0 %v758
        %764 = vmatpush.msra.mxu0 %v757
        %765 = vmatpush.msra.mxu0 %v756
        %766 = vmatpush.msra.mxu0 %v755
        %767 = vmatpush.msra.mxu0 %v754
        %768 = vmatpush.msra.mxu0 %v753
        %769 = vmatpush.msra.mxu0 %v752
        %770 = vmatpush.msra.mxu0 %v751
        %771 = vmatpush.msra.mxu0 %v750
        %772 = vmatpush.msra.mxu0 %v749
        %773 = vmatpush.msra.mxu0 %v748
        %774 = vmatpush.msra.mxu0 %v747
        %775 = vmatpush.msra.mxu0 %v746
        %776 = vmatpush.msra.mxu0 %v745
        %777 = vmatmul.f32.gmra.mxu0 %v739
        %v778 = vpop.f32.mrf.mxu0
        %v779 = vadd.f32 0.0, %v778
        %780 = vmatmul.f32.gmra.mxu0 %v740
        %v781 = vpop.f32.mrf.mxu0
        %v782 = vadd.f32 0.0, %v781
        %783 = vmatmul.f32.gmra.mxu0 %v741
        %v784 = vpop.f32.mrf.mxu0
        %v785 = vadd.f32 0.0, %v784
        %786 = vmatmul.f32.gmra.mxu0 %v742
        %v787 = vpop.f32.mrf.mxu0
        %v788 = vadd.f32 0.0, %v787
        %789 = vmatmul.f32.gmra.mxu0 %v743
        %v790 = vpop.f32.mrf.mxu0
        %v791 = vadd.f32 0.0, %v790
        %792 = vdwg.mxu0
        %v793 = vadd.f32 %v725, %v779
        %v794 = vadd.f32 %v728, %v782
        %v795 = vadd.f32 %v731, %v785
        %v796 = vadd.f32 %v734, %v788
        %v797 = vadd.f32 %v737, %v791
        %v798 = vld [vmem:[#allocation4] sm:$0xff]
        %v799 = vld [vmem:[#allocation4 + $0x8] sm:$0xff]
        %v800 = vld [vmem:[#allocation4 + $0x10] sm:$0xff]
        %v801 = vld [vmem:[#allocation4 + $0x18] sm:$0xff]
        %v802 = vld [vmem:[#allocation13] sm:$0xff]
        %v803 = vld [vmem:[#allocation13 + $0x8] sm:$0xff]
        %v804 = vld [vmem:[#allocation13 + $0x10] sm:$0xff]
        %v805 = vld [vmem:[#allocation13 + $0x18] sm:$0xff]
        %v806 = vld [vmem:[#allocation13 + $0x20] sm:$0xff]
        %v807 = vld [vmem:[#allocation13 + $0x28] sm:$0xff]
        %v808 = vld [vmem:[#allocation13 + $0x30] sm:$0xff]
        %v809 = vld [vmem:[#allocation13 + $0x38] sm:$0xff]
        %v810 = vld [vmem:[#allocation13 + $0x40] sm:$0xff]
        %v811 = vld [vmem:[#allocation13 + $0x48] sm:$0xff]
        %v812 = vld [vmem:[#allocation13 + $0x50] sm:$0xff]
        %v813 = vld [vmem:[#allocation13 + $0x58] sm:$0xff]
        %v814 = vld [vmem:[#allocation13 + $0x60] sm:$0xff]
        %v815 = vld [vmem:[#allocation13 + $0x68] sm:$0xff]
        %v816 = vld [vmem:[#allocation13 + $0x70] sm:$0xff]
        %v817 = vld [vmem:[#allocation13 + $0x78] sm:$0xff]
        %818 = vmatpush.msra.mxu0 %v817
        %819 = vmatpush.msra.mxu0 %v816
        %820 = vmatpush.msra.mxu0 %v815
        %821 = vmatpush.msra.mxu0 %v814
        %822 = vmatpush.msra.mxu0 %v813
        %823 = vmatpush.msra.mxu0 %v812
        %824 = vmatpush.msra.mxu0 %v811
        %825 = vmatpush.msra.mxu0 %v810
        %826 = vmatpush.msra.mxu0 %v809
        %827 = vmatpush.msra.mxu0 %v808
        %828 = vmatpush.msra.mxu0 %v807
        %829 = vmatpush.msra.mxu0 %v806
        %830 = vmatpush.msra.mxu0 %v805
        %831 = vmatpush.msra.mxu0 %v804
        %832 = vmatpush.msra.mxu0 %v803
        %833 = vmatpush.msra.mxu0 %v802
        %834 = vmatmul.f32.gmra.mxu0 %v798
        %v835 = vpop.f32.mrf.mxu0
        %v836 = vadd.f32 0.0, %v835
        %837 = vmatmul.f32.gmra.mxu0 %v799
        %v838 = vpop.f32.mrf.mxu0
        %v839 = vadd.f32 0.0, %v838
        %840 = vmatmul.f32.gmra.mxu0 %v800
        %v841 = vpop.f32.mrf.mxu0
        %v842 = vadd.f32 0.0, %v841
        %843 = vmatmul.f32.gmra.mxu0 %v801
        %v844 = vpop.f32.mrf.mxu0
        %v845 = vadd.f32 0.0, %v844
        %846 = vdwg.mxu0
        %v847 = vadd.f32 %v793, %v836
        %v848 = vadd.f32 %v794, %v839
        %849 = vst [vmem:[%s390] sm:$0xff] %v847
        %850 = vst [vmem:[%s390 + $0x8] sm:$0xff] %v848
        %vm853 = vcmask 1041408
        %v854 = vrot.slane %v842, 6
        %v855 = vrot.slane %v845, 6
        %v856 = vsel %vm853, %v854, %v855
        %v860 = vadd.f32 %v795, %v854
        %v861 = vadd.f32 %v796, %v856
        %v862 = vadd.f32 %v797, %v855
        %s863 = scalar_lea.vmem %s390, 16 [#allocation14]
        %864 = vst [vmem:[%s863 - $0x2] sm:$0xfc] %v860
        %865 = vst [vmem:[%s863 + $0x6] sm:$0xff] %v861
        %866 = vst [vmem:[%s863 + $0xe] sm:$0x3] %v862
        %s867 = sand.u32 %s208, 1
        %s868 = scalar_lea.sflag [#allocation7], %s867
        %s869 = sand.u32 %s208, 1
        %s870 = smul.addr %s869, 32
        %s871 = scalar_lea.vmem [#allocation14], %s870
        // Predicated region
        $region73: #{tpu_custom_call.1} parent=51 // pred_check
          %p872 = pneg %p218
        $region74: #{tpu_custom_call.1} parent=51 // pred_check_branch
          %874 = sbr.rel (%p872) target = $region76
        $region75: #{tpu_custom_call.1} parent=51 // pred_region
          %s875 = smul.u32 2, %s27
          %877 = vsyncadd %s868, 0
          %s878 = smul.addr %s875, 2
          %s879 = smul.addr %s878, 8
          %s880 = scalar_lea.hbm %s8, %s879
          %s881 = sshll.u32 %s871, 4
          %s882 = int_to_ptr.vmem [resolvable:$true] %s881
          %s883 = sshll.u32 %s880, 4
          %s884 = int_to_ptr.hbm [resolvable:$true] %s883
          %889 = dma.vmem_to_hbm [thread:$0]  %s882, 512, %s884, %s868, 128, 128, 8
        $region76: #{tpu_custom_call.1} parent=51 // pred_fallthru
          _
      $region52: #{tpu_custom_call.1} parent=5 // pred_fallthru
        _
      %p890 = scmp.le.s32.totalorder 2, %s22
      // Predicated region
      $region77: #{tpu_custom_call.1} parent=5 // pred_check
        %p891 = pneg %p890
      $region78: #{tpu_custom_call.1} parent=5 // pred_check_branch
        %893 = sbr.rel (%p891) target = $region80
      $region79: #{tpu_custom_call.1} parent=5 // pred_region
        %s894 = ssub.s32 %s22, 2
        // Predicated region
        $region81: #{tpu_custom_call.1} parent=79 // pred_check
          %p895 = pneg %p224
        $region82: #{tpu_custom_call.1} parent=79 // pred_check_branch
          %897 = sbr.rel (%p895) target = $region84
        $region83: #{tpu_custom_call.1} parent=79 // pred_region
          %s898 = sand.u32 %s209, 1
          %s899 = scalar_lea.sflag [#allocation7], %s898
          %s900 = sand.u32 %s209, 1
          %s901 = smul.addr %s900, 32
          %s902 = scalar_lea.vmem [#allocation14], %s901
          %904 = dma.done %s899, 512
        $region84: #{tpu_custom_call.1} parent=79 // pred_fallthru
          _
      $region80: #{tpu_custom_call.1} parent=5 // pred_fallthru
        _
    $region6: #{tpu_custom_call.1} parent=1 // loop_footer
      %s26 = sadd.s32 1, %s22
    $region7: #{tpu_custom_call.1} parent=1 // loop_footer_branch
      %21 = sbr.rel target = $region3
    $region8: #{tpu_custom_call.1} parent=1 // loop_exit
      _
    %905 = vsyncpa [#allocation6], 1
    %s906 = scalar_lea.sflag [#allocation6], 1
    %907 = vsyncpa %s906, 1
    %908 = vsyncpa [#allocation9], 1
    %909 = vsyncpa [#allocation12], 1
    %910 = vsyncpa [#allocation7], 1
    %s911 = scalar_lea.sflag [#allocation7], 1
    %912 = vsyncpa %s911, 1

</llo_original>
